<compile_context>
chip_gen: v7x
topology: tpu7x:2x2x1
jax: 0.10.0
libtpu: 0.0.40
codegen_flags: <defaults>
</compile_context>

<pallas_src>
import functools
import math

import jax
import jax.numpy as jnp
from jax import lax
from jax.experimental import pallas as pl
from jax.experimental.pallas import tpu as pltpu


# ------------------------------- fused kernel -------------------------------

def _mha_fused_kernel(n_heads, d_head,
                      xq_ref, xk_ref, xv_ref, wqkv_ref, wo_ref, bo_ref,
                      o_ref, attn_ref):
    """One batch element per grid step; every intermediate stays in VMEM."""
    T = xq_ref.shape[1]                      # query sequence length
    n_hidden = n_heads * d_head
    n_out = wo_ref.shape[1]
    scale = 1.0 / math.sqrt(d_head)

    xq = xq_ref[0]                           # (T, Din)
    xk = xk_ref[0]                           # (S, Din)
    xv = xv_ref[0]                           # (S, Din)

    # Fused projection weights: W_qkv = [W_q | W_k | W_v]  (Din, 3*n_hidden).
    wq = wqkv_ref[:, 0:n_hidden]
    wk = wqkv_ref[:, n_hidden:2 * n_hidden]
    wv = wqkv_ref[:, 2 * n_hidden:3 * n_hidden]

    # Projections; 1/sqrt(dh) folded into Q.
    q = jnp.dot(xq, wq, preferred_element_type=jnp.float32) * scale   # (T, H*dh)
    k = jnp.dot(xk, wk, preferred_element_type=jnp.float32)           # (S, H*dh)
    v = jnp.dot(xv, wv, preferred_element_type=jnp.float32)           # (S, H*dh)

    # Per-head scaled dot-product attention (mask=None).  QK^T expressed by
    # contracting the last dims of both operands -> no explicit K transpose.
    qkt_dims = (((1,), (1,)), ((), ()))
    for h in range(n_heads):
        sl = slice(h * d_head, (h + 1) * d_head)
        s = lax.dot_general(q[:, sl], k[:, sl], qkt_dims,
                            preferred_element_type=jnp.float32)       # (T, S)
        s = s - jnp.max(s, axis=-1, keepdims=True)
        p = jnp.exp(s)
        p = p * pl.reciprocal(jnp.sum(p, axis=-1, keepdims=True), approx=True)
        attn_ref[h * T:(h + 1) * T, :] = jnp.dot(
            p, v[:, sl], preferred_element_type=jnp.float32)          # (T, dh)

    # Output projection fused with the module's RAW reshape
    # (H, T, dh) -> (T, H*dh)  (no permute, exactly as the PyTorch code):
    #   merged[r, k*dh + dd] = attn_flat[(r*H + k)*dh + dd]
    # => merged[:, k*dh:(k+1)*dh] == attn_ref rows k, k+H, k+2H, ...
    # => merged @ W_o == sum_k attn_ref[k::H, :] @ W_o[k*dh:(k+1)*dh, :]
    acc = jnp.zeros((T, n_out), jnp.float32)
    for blk in range(n_heads):
        rows = attn_ref[pl.ds(blk, T, stride=n_heads), :]             # (T, dh)
        acc = acc + jnp.dot(rows, wo_ref[blk * d_head:(blk + 1) * d_head, :],
                            preferred_element_type=jnp.float32)
    o_ref[0] = acc + bo_ref[...]


# -------------------------------- wrapper ------------------------------------

def multi_head_attention(queries, keys, values, params, n_heads):
    """Fused MHA forward: one pallas_call, grid over the batch dimension."""
    W_q, W_k, W_v, W_o, b_o = params
    B, Tq, Din = queries.shape
    Bk, Tk, Dink = keys.shape
    assert values.shape == keys.shape and Bk == B and Dink == Din
    n_hidden = W_q.shape[1]
    n_out = W_o.shape[1]
    assert n_hidden % n_heads == 0
    d_head = n_hidden // n_heads

    # One weight slab -> one weight DMA per grid step instead of three.
    W_qkv = jnp.concatenate([W_q, W_k, W_v], axis=1)      # (Din, 3*n_hidden)
    b2 = b_o.reshape(1, n_out)

    kernel = functools.partial(_mha_fused_kernel, n_heads, d_head)

    q_spec = pl.BlockSpec((1, Tq, Din), lambda b: (b, 0, 0))
    kv_spec = pl.BlockSpec((1, Tk, Din), lambda b: (b, 0, 0))

    return pl.pallas_call(
        kernel,
        grid=(B,),
        in_specs=[q_spec, kv_spec, kv_spec,
                  pl.BlockSpec((Din, 3 * n_hidden), lambda b: (0, 0)),
                  pl.BlockSpec((n_hidden, n_out), lambda b: (0, 0)),
                  pl.BlockSpec((1, n_out), lambda b: (0, 0))],
        out_specs=pl.BlockSpec((1, Tq, n_out), lambda b: (b, 0, 0)),
        out_shape=jax.ShapeDtypeStruct((B, Tq, n_out), jnp.float32),
        scratch_shapes=[pltpu.VMEM((n_heads * Tq, d_head), jnp.float32)],
        compiler_params=pltpu.CompilerParams(
            # "parallel" over B: v7x's two TensorCores each take batch rows
            # (no-op on single-TC v5e/v6e).
            dimension_semantics=("parallel",)),
    )(queries, keys, values, W_qkv, W_o, b2)


# --------------------------- pure-JAX reference -------------------------------

def _reference_mha(queries, keys, values, params, n_heads):
    """Literal replica of the PyTorch module's forward (for validation)."""
    W_q, W_k, W_v, W_o, b_o = params

    def transpose_qkv(x):
        B, T, nh = x.shape
        return jnp.transpose(x.reshape(B, T, n_heads, nh // n_heads), (0, 2, 1, 3))

    Q = transpose_qkv(queries @ W_q)
    K = transpose_qkv(keys @ W_k)
    V = transpose_qkv(values @ W_v)
    d = Q.shape[-1]
    s = jnp.einsum("bhtd,bhsd->bhts", Q, K) / math.sqrt(d)
    p = jax.nn.softmax(s, axis=-1)
    out = jnp.einsum("bhts,bhsd->bhtd", p, V)            # (B, H, T, dh)
    out = out.reshape(out.shape[0], out.shape[2], -1)    # raw reshape, no permute
    return out @ W_o + b_o


# ----------------------------------- main -------------------------------------

if __name__ == "__main__":
    B, T = 2, 8
    D_in = 32          # lazy-inferred input feature dim
    n_heads = 4
    n_hidden = 32      # divisible by n_heads
    n_out = 32

    key = jax.random.PRNGKey(0)
    kq, kk, kv, kwq, kwk, kwv, kwo, kbo = jax.random.split(key, 8)

    queries = jax.random.normal(kq, (B, T, D_in), dtype=jnp.float32)
    keys = jax.random.normal(kk, (B, T, D_in), dtype=jnp.float32)
    values = jax.random.normal(kv, (B, T, D_in), dtype=jnp.float32)

    # Deterministic parameter init (Linear weights stored as (in, out)).
    s = 1.0 / math.sqrt(D_in)
    W_q = jax.random.uniform(kwq, (D_in, n_hidden), jnp.float32, -s, s)
    W_k = jax.random.uniform(kwk, (D_in, n_hidden), jnp.float32, -s, s)
    W_v = jax.random.uniform(kwv, (D_in, n_hidden), jnp.float32, -s, s)
    so = 1.0 / math.sqrt(n_hidden)
    W_o = jax.random.uniform(kwo, (n_hidden, n_out), jnp.float32, -so, so)
    b_o = jax.random.uniform(kbo, (n_out,), jnp.float32, -so, so)

    params = (W_q, W_k, W_v, W_o, b_o)

    out = multi_head_attention(queries, keys, values, params, n_heads)
    jax.block_until_ready(out)
    assert out.shape == (B, T, n_out), out.shape

    # Validate against the literal (pure-JAX) forward; tolerance covers the
    # approximate EUP reciprocal used for the softmax denominator.
    ref = _reference_mha(queries, keys, values, params, n_heads)
    max_err = float(jnp.max(jnp.abs(out - ref)))
    assert max_err < 2e-2, max_err

    print("KERNEL_OK")
</pallas_src>

<mosaic_0001>
module attributes {stable_mosaic.version = 11 : i64} {
  func.func @_mha_fused_kernel(%arg0: i32, %arg1: memref<1x8x32xf32, #tpu.memory_space<vmem>>, %arg2: memref<1x8x32xf32, #tpu.memory_space<vmem>>, %arg3: memref<1x8x32xf32, #tpu.memory_space<vmem>>, %arg4: memref<32x96xf32, #tpu.memory_space<vmem>>, %arg5: memref<32x32xf32, #tpu.memory_space<vmem>>, %arg6: memref<1x32xf32, #tpu.memory_space<vmem>>, %arg7: memref<1x8x32xf32, #tpu.memory_space<vmem>>, %arg8: memref<32x8xf32, #tpu.memory_space<vmem>>) attributes {dimension_semantics = [#tpu.dimension_semantics<parallel>], iteration_bounds = array<i64: 2>, scalar_prefetch = 0 : i64, scratch_operands = 1 : i64, tpu.core_type = #tpu.core_type<tc>, window_params = [{transform_indices = @transform_0, window_bounds = array<i64: 1, 8, 32>}, {transform_indices = @transform_1, window_bounds = array<i64: 1, 8, 32>}, {transform_indices = @transform_2, window_bounds = array<i64: 1, 8, 32>}, {pipeline_mode = #tpu.pipeline_mode<synchronous>, transform_indices = @transform_3, window_bounds = array<i64: 32, 96>}, {pipeline_mode = #tpu.pipeline_mode<synchronous>, transform_indices = @transform_4, window_bounds = array<i64: 32, 32>}, {pipeline_mode = #tpu.pipeline_mode<synchronous>, transform_indices = @transform_5, window_bounds = array<i64: 1, 32>}, {transform_indices = @transform_6, window_bounds = array<i64: 1, 8, 32>}]} {
    %c0 = arith.constant 0 : index
    %c0_0 = arith.constant 0 : index
    %c0_1 = arith.constant 0 : index
    %0 = vector.load %arg1[%c0, %c0_0, %c0_1] : memref<1x8x32xf32, #tpu.memory_space<vmem>>, vector<1x8x32xf32>
    %1 = vector.shape_cast %0 : vector<1x8x32xf32> to vector<8x32xf32>
    %c0_2 = arith.constant 0 : index
    %c0_3 = arith.constant 0 : index
    %c0_4 = arith.constant 0 : index
    %2 = vector.load %arg2[%c0_2, %c0_3, %c0_4] : memref<1x8x32xf32, #tpu.memory_space<vmem>>, vector<1x8x32xf32>
    %3 = vector.shape_cast %2 : vector<1x8x32xf32> to vector<8x32xf32>
    %c0_5 = arith.constant 0 : index
    %c0_6 = arith.constant 0 : index
    %c0_7 = arith.constant 0 : index
    %4 = vector.load %arg3[%c0_5, %c0_6, %c0_7] : memref<1x8x32xf32, #tpu.memory_space<vmem>>, vector<1x8x32xf32>
    %5 = vector.shape_cast %4 : vector<1x8x32xf32> to vector<8x32xf32>
    %c0_8 = arith.constant 0 : index
    %c0_9 = arith.constant 0 : index
    %6 = vector.load %arg4[%c0_8, %c0_9] : memref<32x96xf32, #tpu.memory_space<vmem>>, vector<32x32xf32>
    %c0_10 = arith.constant 0 : index
    %c32 = arith.constant 32 : index
    %7 = vector.load %arg4[%c0_10, %c32] : memref<32x96xf32, #tpu.memory_space<vmem>>, vector<32x32xf32>
    %c0_11 = arith.constant 0 : index
    %c64 = arith.constant 64 : index
    %8 = vector.load %arg4[%c0_11, %c64] : memref<32x96xf32, #tpu.memory_space<vmem>>, vector<32x32xf32>
    %cst = arith.constant dense<0.000000e+00> : vector<8x32xf32>
    %9 = tpu.matmul %1, %6, %cst {dimension_numbers = #tpu.dot_dimension_numbers<[1], [0], [0], [1], [0, 0, 1, 1], [], []>} : vector<8x32xf32>, vector<32x32xf32>, vector<8x32xf32> -> vector<8x32xf32>
    %cst_12 = arith.constant 0.353553385 : f32
    %10 = vector.broadcast %cst_12 : f32 to vector<8x32xf32>
    %11 = arith.mulf %9, %10 : vector<8x32xf32>
    %cst_13 = arith.constant dense<0.000000e+00> : vector<8x32xf32>
    %12 = tpu.matmul %3, %7, %cst_13 {dimension_numbers = #tpu.dot_dimension_numbers<[1], [0], [0], [1], [0, 0, 1, 1], [], []>} : vector<8x32xf32>, vector<32x32xf32>, vector<8x32xf32> -> vector<8x32xf32>
    %cst_14 = arith.constant dense<0.000000e+00> : vector<8x32xf32>
    %13 = tpu.matmul %5, %8, %cst_14 {dimension_numbers = #tpu.dot_dimension_numbers<[1], [0], [0], [1], [0, 0, 1, 1], [], []>} : vector<8x32xf32>, vector<32x32xf32>, vector<8x32xf32> -> vector<8x32xf32>
    %14 = vector.extract_strided_slice %11 {offsets = [0, 0], sizes = [8, 8], strides = [1, 1]} : vector<8x32xf32> to vector<8x8xf32>
    %15 = vector.extract_strided_slice %12 {offsets = [0, 0], sizes = [8, 8], strides = [1, 1]} : vector<8x32xf32> to vector<8x8xf32>
    %cst_15 = arith.constant dense<0.000000e+00> : vector<8x8xf32>
    %16 = tpu.matmul %14, %15, %cst_15 {dimension_numbers = #tpu.dot_dimension_numbers<[1], [1], [0], [0], [0, 0, 1, 0], [], []>} : vector<8x8xf32>, vector<8x8xf32>, vector<8x8xf32> -> vector<8x8xf32>
    %cst_16 = arith.constant dense<0xFF800000> : vector<8xf32>
    %17 = vector.multi_reduction <maximumf>, %16, %cst_16 [1] : vector<8x8xf32> to vector<8xf32>
    %18 = vector.shape_cast %17 : vector<8xf32> to vector<8x1xf32>
    %19 = vector.broadcast %18 : vector<8x1xf32> to vector<8x8xf32>
    %20 = arith.subf %16, %19 : vector<8x8xf32>
    %21 = math.exp %20 : vector<8x8xf32>
    %cst_17 = arith.constant dense<0.000000e+00> : vector<8xf32>
    %22 = vector.multi_reduction <add>, %21, %cst_17 [1] : vector<8x8xf32> to vector<8xf32>
    %23 = vector.shape_cast %22 : vector<8xf32> to vector<8x1xf32>
    %24 = tpu.reciprocal %23 {approx = true} : vector<8x1xf32> -> vector<8x1xf32>
    %25 = vector.broadcast %24 : vector<8x1xf32> to vector<8x8xf32>
    %26 = arith.mulf %21, %25 : vector<8x8xf32>
    %27 = vector.extract_strided_slice %13 {offsets = [0, 0], sizes = [8, 8], strides = [1, 1]} : vector<8x32xf32> to vector<8x8xf32>
    %cst_18 = arith.constant dense<0.000000e+00> : vector<8x8xf32>
    %28 = tpu.matmul %26, %27, %cst_18 {dimension_numbers = #tpu.dot_dimension_numbers<[1], [0], [0], [1], [0, 0, 1, 1], [], []>} : vector<8x8xf32>, vector<8x8xf32>, vector<8x8xf32> -> vector<8x8xf32>
    %c0_19 = arith.constant 0 : index
    %c0_20 = arith.constant 0 : index
    %29 = vector.load %arg8[%c0_19, %c0_20] : memref<32x8xf32, #tpu.memory_space<vmem>>, vector<8x8xf32>
    tpu.vector_store %arg8[%c0_19, %c0_20], %28 {strides = array<i32>} : memref<32x8xf32, #tpu.memory_space<vmem>>, vector<8x8xf32>,
    %30 = vector.extract_strided_slice %11 {offsets = [0, 8], sizes = [8, 8], strides = [1, 1]} : vector<8x32xf32> to vector<8x8xf32>
    %31 = vector.extract_strided_slice %12 {offsets = [0, 8], sizes = [8, 8], strides = [1, 1]} : vector<8x32xf32> to vector<8x8xf32>
    %cst_21 = arith.constant dense<0.000000e+00> : vector<8x8xf32>
    %32 = tpu.matmul %30, %31, %cst_21 {dimension_numbers = #tpu.dot_dimension_numbers<[1], [1], [0], [0], [0, 0, 1, 0], [], []>} : vector<8x8xf32>, vector<8x8xf32>, vector<8x8xf32> -> vector<8x8xf32>
    %cst_22 = arith.constant dense<0xFF800000> : vector<8xf32>
    %33 = vector.multi_reduction <maximumf>, %32, %cst_22 [1] : vector<8x8xf32> to vector<8xf32>
    %34 = vector.shape_cast %33 : vector<8xf32> to vector<8x1xf32>
    %35 = vector.broadcast %34 : vector<8x1xf32> to vector<8x8xf32>
    %36 = arith.subf %32, %35 : vector<8x8xf32>
    %37 = math.exp %36 : vector<8x8xf32>
    %cst_23 = arith.constant dense<0.000000e+00> : vector<8xf32>
    %38 = vector.multi_reduction <add>, %37, %cst_23 [1] : vector<8x8xf32> to vector<8xf32>
    %39 = vector.shape_cast %38 : vector<8xf32> to vector<8x1xf32>
    %40 = tpu.reciprocal %39 {approx = true} : vector<8x1xf32> -> vector<8x1xf32>
    %41 = vector.broadcast %40 : vector<8x1xf32> to vector<8x8xf32>
    %42 = arith.mulf %37, %41 : vector<8x8xf32>
    %43 = vector.extract_strided_slice %13 {offsets = [0, 8], sizes = [8, 8], strides = [1, 1]} : vector<8x32xf32> to vector<8x8xf32>
    %cst_24 = arith.constant dense<0.000000e+00> : vector<8x8xf32>
    %44 = tpu.matmul %42, %43, %cst_24 {dimension_numbers = #tpu.dot_dimension_numbers<[1], [0], [0], [1], [0, 0, 1, 1], [], []>} : vector<8x8xf32>, vector<8x8xf32>, vector<8x8xf32> -> vector<8x8xf32>
    %c8 = arith.constant 8 : index
    %c0_25 = arith.constant 0 : index
    %45 = vector.load %arg8[%c8, %c0_25] : memref<32x8xf32, #tpu.memory_space<vmem>>, vector<8x8xf32>
    tpu.vector_store %arg8[%c8, %c0_25], %44 {strides = array<i32>} : memref<32x8xf32, #tpu.memory_space<vmem>>, vector<8x8xf32>,
    %46 = vector.extract_strided_slice %11 {offsets = [0, 16], sizes = [8, 8], strides = [1, 1]} : vector<8x32xf32> to vector<8x8xf32>
    %47 = vector.extract_strided_slice %12 {offsets = [0, 16], sizes = [8, 8], strides = [1, 1]} : vector<8x32xf32> to vector<8x8xf32>
    %cst_26 = arith.constant dense<0.000000e+00> : vector<8x8xf32>
    %48 = tpu.matmul %46, %47, %cst_26 {dimension_numbers = #tpu.dot_dimension_numbers<[1], [1], [0], [0], [0, 0, 1, 0], [], []>} : vector<8x8xf32>, vector<8x8xf32>, vector<8x8xf32> -> vector<8x8xf32>
    %cst_27 = arith.constant dense<0xFF800000> : vector<8xf32>
    %49 = vector.multi_reduction <maximumf>, %48, %cst_27 [1] : vector<8x8xf32> to vector<8xf32>
    %50 = vector.shape_cast %49 : vector<8xf32> to vector<8x1xf32>
    %51 = vector.broadcast %50 : vector<8x1xf32> to vector<8x8xf32>
    %52 = arith.subf %48, %51 : vector<8x8xf32>
    %53 = math.exp %52 : vector<8x8xf32>
    %cst_28 = arith.constant dense<0.000000e+00> : vector<8xf32>
    %54 = vector.multi_reduction <add>, %53, %cst_28 [1] : vector<8x8xf32> to vector<8xf32>
    %55 = vector.shape_cast %54 : vector<8xf32> to vector<8x1xf32>
    %56 = tpu.reciprocal %55 {approx = true} : vector<8x1xf32> -> vector<8x1xf32>
    %57 = vector.broadcast %56 : vector<8x1xf32> to vector<8x8xf32>
    %58 = arith.mulf %53, %57 : vector<8x8xf32>
    %59 = vector.extract_strided_slice %13 {offsets = [0, 16], sizes = [8, 8], strides = [1, 1]} : vector<8x32xf32> to vector<8x8xf32>
    %cst_29 = arith.constant dense<0.000000e+00> : vector<8x8xf32>
    %60 = tpu.matmul %58, %59, %cst_29 {dimension_numbers = #tpu.dot_dimension_numbers<[1], [0], [0], [1], [0, 0, 1, 1], [], []>} : vector<8x8xf32>, vector<8x8xf32>, vector<8x8xf32> -> vector<8x8xf32>
    %c16 = arith.constant 16 : index
    %c0_30 = arith.constant 0 : index
    %61 = vector.load %arg8[%c16, %c0_30] : memref<32x8xf32, #tpu.memory_space<vmem>>, vector<8x8xf32>
    tpu.vector_store %arg8[%c16, %c0_30], %60 {strides = array<i32>} : memref<32x8xf32, #tpu.memory_space<vmem>>, vector<8x8xf32>,
    %62 = vector.extract_strided_slice %11 {offsets = [0, 24], sizes = [8, 8], strides = [1, 1]} : vector<8x32xf32> to vector<8x8xf32>
    %63 = vector.extract_strided_slice %12 {offsets = [0, 24], sizes = [8, 8], strides = [1, 1]} : vector<8x32xf32> to vector<8x8xf32>
    %cst_31 = arith.constant dense<0.000000e+00> : vector<8x8xf32>
    %64 = tpu.matmul %62, %63, %cst_31 {dimension_numbers = #tpu.dot_dimension_numbers<[1], [1], [0], [0], [0, 0, 1, 0], [], []>} : vector<8x8xf32>, vector<8x8xf32>, vector<8x8xf32> -> vector<8x8xf32>
    %cst_32 = arith.constant dense<0xFF800000> : vector<8xf32>
    %65 = vector.multi_reduction <maximumf>, %64, %cst_32 [1] : vector<8x8xf32> to vector<8xf32>
    %66 = vector.shape_cast %65 : vector<8xf32> to vector<8x1xf32>
    %67 = vector.broadcast %66 : vector<8x1xf32> to vector<8x8xf32>
    %68 = arith.subf %64, %67 : vector<8x8xf32>
    %69 = math.exp %68 : vector<8x8xf32>
    %cst_33 = arith.constant dense<0.000000e+00> : vector<8xf32>
    %70 = vector.multi_reduction <add>, %69, %cst_33 [1] : vector<8x8xf32> to vector<8xf32>
    %71 = vector.shape_cast %70 : vector<8xf32> to vector<8x1xf32>
    %72 = tpu.reciprocal %71 {approx = true} : vector<8x1xf32> -> vector<8x1xf32>
    %73 = vector.broadcast %72 : vector<8x1xf32> to vector<8x8xf32>
    %74 = arith.mulf %69, %73 : vector<8x8xf32>
    %75 = vector.extract_strided_slice %13 {offsets = [0, 24], sizes = [8, 8], strides = [1, 1]} : vector<8x32xf32> to vector<8x8xf32>
    %cst_34 = arith.constant dense<0.000000e+00> : vector<8x8xf32>
    %76 = tpu.matmul %74, %75, %cst_34 {dimension_numbers = #tpu.dot_dimension_numbers<[1], [0], [0], [1], [0, 0, 1, 1], [], []>} : vector<8x8xf32>, vector<8x8xf32>, vector<8x8xf32> -> vector<8x8xf32>
    %c24 = arith.constant 24 : index
    %c0_35 = arith.constant 0 : index
    %77 = vector.load %arg8[%c24, %c0_35] : memref<32x8xf32, #tpu.memory_space<vmem>>, vector<8x8xf32>
    tpu.vector_store %arg8[%c24, %c0_35], %76 {strides = array<i32>} : memref<32x8xf32, #tpu.memory_space<vmem>>, vector<8x8xf32>,
    %cst_36 = arith.constant 0.000000e+00 : f32
    %78 = vector.broadcast %cst_36 : f32 to vector<8x32xf32>
    %c0_37 = arith.constant 0 : index
    %c0_38 = arith.constant 0 : index
    %79 = tpu.strided_load %arg8[%c0_37, %c0_38] {strides = array<i32: 4, 1>} : memref<32x8xf32, #tpu.memory_space<vmem>>, vector<8x8xf32>
    %c0_39 = arith.constant 0 : index
    %c0_40 = arith.constant 0 : index
    %80 = vector.load %arg5[%c0_39, %c0_40] : memref<32x32xf32, #tpu.memory_space<vmem>>, vector<8x32xf32>
    %cst_41 = arith.constant dense<0.000000e+00> : vector<8x32xf32>
    %81 = tpu.matmul %79, %80, %cst_41 {dimension_numbers = #tpu.dot_dimension_numbers<[1], [0], [0], [1], [0, 0, 1, 1], [], []>} : vector<8x8xf32>, vector<8x32xf32>, vector<8x32xf32> -> vector<8x32xf32>
    %82 = arith.addf %78, %81 : vector<8x32xf32>
    %c1 = arith.constant 1 : index
    %c0_42 = arith.constant 0 : index
    %83 = tpu.strided_load %arg8[%c1, %c0_42] {strides = array<i32: 4, 1>} : memref<32x8xf32, #tpu.memory_space<vmem>>, vector<8x8xf32>
    %c8_43 = arith.constant 8 : index
    %c0_44 = arith.constant 0 : index
    %84 = vector.load %arg5[%c8_43, %c0_44] : memref<32x32xf32, #tpu.memory_space<vmem>>, vector<8x32xf32>
    %cst_45 = arith.constant dense<0.000000e+00> : vector<8x32xf32>
    %85 = tpu.matmul %83, %84, %cst_45 {dimension_numbers = #tpu.dot_dimension_numbers<[1], [0], [0], [1], [0, 0, 1, 1], [], []>} : vector<8x8xf32>, vector<8x32xf32>, vector<8x32xf32> -> vector<8x32xf32>
    %86 = arith.addf %82, %85 : vector<8x32xf32>
    %c2 = arith.constant 2 : index
    %c0_46 = arith.constant 0 : index
    %87 = tpu.strided_load %arg8[%c2, %c0_46] {strides = array<i32: 4, 1>} : memref<32x8xf32, #tpu.memory_space<vmem>>, vector<8x8xf32>
    %c16_47 = arith.constant 16 : index
    %c0_48 = arith.constant 0 : index
    %88 = vector.load %arg5[%c16_47, %c0_48] : memref<32x32xf32, #tpu.memory_space<vmem>>, vector<8x32xf32>
    %cst_49 = arith.constant dense<0.000000e+00> : vector<8x32xf32>
    %89 = tpu.matmul %87, %88, %cst_49 {dimension_numbers = #tpu.dot_dimension_numbers<[1], [0], [0], [1], [0, 0, 1, 1], [], []>} : vector<8x8xf32>, vector<8x32xf32>, vector<8x32xf32> -> vector<8x32xf32>
    %90 = arith.addf %86, %89 : vector<8x32xf32>
    %c3 = arith.constant 3 : index
    %c0_50 = arith.constant 0 : index
    %91 = tpu.strided_load %arg8[%c3, %c0_50] {strides = array<i32: 4, 1>} : memref<32x8xf32, #tpu.memory_space<vmem>>, vector<8x8xf32>
    %c24_51 = arith.constant 24 : index
    %c0_52 = arith.constant 0 : index
    %92 = vector.load %arg5[%c24_51, %c0_52] : memref<32x32xf32, #tpu.memory_space<vmem>>, vector<8x32xf32>
    %cst_53 = arith.constant dense<0.000000e+00> : vector<8x32xf32>
    %93 = tpu.matmul %91, %92, %cst_53 {dimension_numbers = #tpu.dot_dimension_numbers<[1], [0], [0], [1], [0, 0, 1, 1], [], []>} : vector<8x8xf32>, vector<8x32xf32>, vector<8x32xf32> -> vector<8x32xf32>
    %94 = arith.addf %90, %93 : vector<8x32xf32>
    %c0_54 = arith.constant 0 : index
    %c0_55 = arith.constant 0 : index
    %95 = vector.load %arg6[%c0_54, %c0_55] : memref<1x32xf32, #tpu.memory_space<vmem>>, vector<1x32xf32>
    %96 = vector.broadcast %95 : vector<1x32xf32> to vector<8x32xf32>
    %97 = arith.addf %94, %96 : vector<8x32xf32>
    %c0_56 = arith.constant 0 : index
    %c0_57 = arith.constant 0 : index
    %c0_58 = arith.constant 0 : index
    %98 = vector.load %arg7[%c0_56, %c0_57, %c0_58] : memref<1x8x32xf32, #tpu.memory_space<vmem>>, vector<1x8x32xf32>
    %99 = vector.shape_cast %98 : vector<1x8x32xf32> to vector<8x32xf32>
    %100 = vector.shape_cast %97 : vector<8x32xf32> to vector<1x8x32xf32>
    tpu.vector_store %arg7[%c0_56, %c0_57, %c0_58], %100 {strides = array<i32>} : memref<1x8x32xf32, #tpu.memory_space<vmem>>, vector<1x8x32xf32>,
    return
  }
  func.func @transform_0(%arg0: i32) -> (i32, i32, i32) {
    %c0_i32 = arith.constant 0 : i32
    %c0_i32_0 = arith.constant 0 : i32
    %c0_i32_1 = arith.constant 0 : i32
    return %arg0, %c0_i32, %c0_i32_0 : i32, i32, i32
  }
  func.func @transform_1(%arg0: i32) -> (i32, i32, i32) {
    %c0_i32 = arith.constant 0 : i32
    %c0_i32_0 = arith.constant 0 : i32
    %c0_i32_1 = arith.constant 0 : i32
    return %arg0, %c0_i32, %c0_i32_0 : i32, i32, i32
  }
  func.func @transform_2(%arg0: i32) -> (i32, i32, i32) {
    %c0_i32 = arith.constant 0 : i32
    %c0_i32_0 = arith.constant 0 : i32
    %c0_i32_1 = arith.constant 0 : i32
    return %arg0, %c0_i32, %c0_i32_0 : i32, i32, i32
  }
  func.func @transform_3(%arg0: i32) -> (i32, i32) {
    %c0_i32 = arith.constant 0 : i32
    %c0_i32_0 = arith.constant 0 : i32
    %c0_i32_1 = arith.constant 0 : i32
    return %c0_i32, %c0_i32_0 : i32, i32
  }
  func.func @transform_4(%arg0: i32) -> (i32, i32) {
    %c0_i32 = arith.constant 0 : i32
    %c0_i32_0 = arith.constant 0 : i32
    %c0_i32_1 = arith.constant 0 : i32
    return %c0_i32, %c0_i32_0 : i32, i32
  }
  func.func @transform_5(%arg0: i32) -> (i32, i32) {
    %c0_i32 = arith.constant 0 : i32
    %c0_i32_0 = arith.constant 0 : i32
    %c0_i32_1 = arith.constant 0 : i32
    return %c0_i32, %c0_i32_0 : i32, i32
  }
  func.func @transform_6(%arg0: i32) -> (i32, i32, i32) {
    %c0_i32 = arith.constant 0 : i32
    %c0_i32_0 = arith.constant 0 : i32
    %c0_i32_1 = arith.constant 0 : i32
    return %arg0, %c0_i32, %c0_i32_0 : i32, i32, i32
  }
}

</mosaic_0001>

<llo_original>
// kernel: tpu_custom_call.1
$region0: #{tpu_custom_call.1}
  #allocation0 [shape = 'u32[]', space=smem, size = 0x4, offset = 0x4, fixed_abs, tag = 'smem constant byte address 0x4 - core index']
  #allocation1 [shape = 'u32[144,128]{1,0:T(1,128)}', space=vmem, size = 0x12000, scoped, tag = 'internal scratch']
  #allocation2 [shape = 'f32[32,8]{1,0:T(8,128)}', space=vmem, size = 0x4000, scoped, tag = 'scratch operand']
  %s0 = inlined_call_operand.hbm [shape: f32[2,8,32], index: 0, kind: input, shape index: {}]
  %s1 = inlined_call_operand.hbm [shape: f32[2,8,32], index: 1, kind: input, shape index: {}]
  %s2 = inlined_call_operand.hbm [shape: f32[2,8,32], index: 2, kind: input, shape index: {}]
  %s3 = inlined_call_operand.hbm [shape: f32[32,96], index: 3, kind: input, shape index: {}]
  %s4 = inlined_call_operand.hbm [shape: f32[32,32], index: 4, kind: input, shape index: {}]
  %s5 = inlined_call_operand.vmem [shape: f32[1,32], index: 5, kind: input, shape index: {}]
  %s6 = inlined_call_operand.hbm [shape: f32[2,8,32], index: 6, kind: output, shape index: {}]
  %s7 = sld [smem:[#allocation0]]
  $region77: #{tpu_custom_call.1} parent=0
    _
  %s9 = ssub.s32 1, %s7
  %s10 = scalar_select 0, %s9, %s7
  $region1: #{tpu_custom_call.1} parent=0
    #allocation3 [shape = 'u8[8192]{0}', space=vmem, size = 0x2000, scoped, tag = 'input window, operand 0']
    #allocation4 [shape = 's32[2]{0}', space=sflag, size = 0x8, scoped, tag = 'scoped memory for tpu_custom_call.1']
    #allocation5 [shape = 's32[2]{0}', space=sflag, size = 0x8, scoped, tag = 'scoped memory for tpu_custom_call.1']
    #allocation6 [shape = 'u8[8192]{0}', space=vmem, size = 0x2000, scoped, tag = 'input window, operand 1']
    #allocation7 [shape = 's32[2]{0}', space=sflag, size = 0x8, scoped, tag = 'scoped memory for tpu_custom_call.1']
    #allocation8 [shape = 'u8[8192]{0}', space=vmem, size = 0x2000, scoped, tag = 'input window, operand 2']
    #allocation9 [shape = 'u8[16384]{0}', space=vmem, size = 0x4000, scoped, tag = 'input window, operand 3, single buffered']
    #allocation10 [shape = 's32[1]{0}', space=sflag, size = 0x4, scoped, tag = 'scoped memory for tpu_custom_call.1']
    #allocation11 [shape = 'u8[16384]{0}', space=vmem, size = 0x4000, scoped, tag = 'input window, operand 4, single buffered']
    #allocation12 [shape = 'u8[8192]{0}', space=vmem, size = 0x2000, scoped, tag = 'output window, operand 0']
    %11 = vsyncpa [#allocation4], 0
    %s12 = scalar_lea.sflag [#allocation4], 1
    %13 = vsyncpa %s12, 0
    %14 = vsyncpa [#allocation7], 0
    %s15 = scalar_lea.sflag [#allocation7], 1
    %16 = vsyncpa %s15, 0
    %17 = vsyncpa [#allocation10], 0
    %18 = vsyncpa [#allocation5], 0
    %s19 = scalar_lea.sflag [#allocation5], 1
    %20 = vsyncpa %s19, 0
    loop: start=0, step=1, limit=4
    $region2: #{tpu_custom_call.1} parent=1 // loop_pre_header
      _
    $region3: #{tpu_custom_call.1} parent=1 // loop_header
      %s22 = sphi 0, %s26
      %p23 = scmp.ge.s32.totalorder %s22, 4
      %s32 = sphi 0, %s34
      %s35 = sphi 0, %s32
      %s36 = sphi 0, %s35
      %s52 = sphi 0, %s36
      %s58 = sphi 0, %s60
      %s61 = sphi 0, %s58
      %s62 = sphi 0, %s61
      %s78 = sphi 0, %s62
      %s84 = sphi 0, %s86
      %s87 = sphi 0, %s84
      %s88 = sphi 0, %s87
      %s104 = sphi 0, %s88
      %s108 = sphi 0, %s108
      %s110 = sphi 0, %s108
      %s111 = sphi 0, %s110
      %s125 = sphi 0, %s111
      %s129 = sphi 0, %s129
      %s131 = sphi 0, %s129
      %s132 = sphi 0, %s131
      %s146 = sphi 0, %s132
      %s150 = sphi 0, %s150
      %s152 = sphi 0, %s150
      %s153 = sphi 0, %s152
      %s167 = sphi 0, %s153
      %s173 = sphi 0, %s175
      %s176 = sphi 0, %s173
      %s177 = sphi 0, %s176
      %s193 = sphi 0, %s177
    $region4: #{tpu_custom_call.1} parent=1 // loop_header_branch
      %25 = sbr.rel (%p23) target = $region8
    $region5: #{tpu_custom_call.1} parent=1 // loop_body
      %s27 = ssub.s32 %s22, 1
      %s28 = ssub.s32 %s22, 2
      %s29 = sadd.s32 %s22, 1
      %s30 = ssub.s32 %s22, %s29
      %p31 = scmp.eq.s32.totalorder %s30, 0
      %s33 = sadd.s32 %s32, 1
      %s34 = scalar_select %p31, %s32, %s33
      %p37 = pneg %p31
      %p38 = scmp.eq.s32.totalorder %s22, 1
      %p39 = por %p37, %p38
      %p40 = scmp.ne.s32.totalorder %s32, %s35
      %p41 = scmp.eq.s32.totalorder %s22, 0
      %p42 = por %p40, %p41
      %p43 = scmp.ne.s32.totalorder %s32, %s35
      %p44 = scmp.eq.s32.totalorder %s27, 1
      %p45 = por %p43, %p44
      %p46 = scmp.ne.s32.totalorder %s35, %s36
      %p47 = scmp.eq.s32.totalorder %s27, 0
      %p48 = por %p46, %p47
      %p49 = scmp.ne.s32.totalorder %s35, %s36
      %p50 = scmp.eq.s32.totalorder %s28, 1
      %p51 = por %p49, %p50
      %p53 = scmp.ne.s32.totalorder %s36, %s52
      %p54 = scmp.eq.s32.totalorder %s28, 0
      %p55 = por %p53, %p54
      %s56 = ssub.s32 %s22, %s29
      %p57 = scmp.eq.s32.totalorder %s56, 0
      %s59 = sadd.s32 %s58, 1
      %s60 = scalar_select %p57, %s58, %s59
      %p63 = pneg %p57
      %p64 = scmp.eq.s32.totalorder %s22, 1
      %p65 = por %p63, %p64
      %p66 = scmp.ne.s32.totalorder %s58, %s61
      %p67 = scmp.eq.s32.totalorder %s22, 0
      %p68 = por %p66, %p67
      %p69 = scmp.ne.s32.totalorder %s58, %s61
      %p70 = scmp.eq.s32.totalorder %s27, 1
      %p71 = por %p69, %p70
      %p72 = scmp.ne.s32.totalorder %s61, %s62
      %p73 = scmp.eq.s32.totalorder %s27, 0
      %p74 = por %p72, %p73
      %p75 = scmp.ne.s32.totalorder %s61, %s62
      %p76 = scmp.eq.s32.totalorder %s28, 1
      %p77 = por %p75, %p76
      %p79 = scmp.ne.s32.totalorder %s62, %s78
      %p80 = scmp.eq.s32.totalorder %s28, 0
      %p81 = por %p79, %p80
      %s82 = ssub.s32 %s22, %s29
      %p83 = scmp.eq.s32.totalorder %s82, 0
      %s85 = sadd.s32 %s84, 1
      %s86 = scalar_select %p83, %s84, %s85
      %p89 = pneg %p83
      %p90 = scmp.eq.s32.totalorder %s22, 1
      %p91 = por %p89, %p90
      %p92 = scmp.ne.s32.totalorder %s84, %s87
      %p93 = scmp.eq.s32.totalorder %s22, 0
      %p94 = por %p92, %p93
      %p95 = scmp.ne.s32.totalorder %s84, %s87
      %p96 = scmp.eq.s32.totalorder %s27, 1
      %p97 = por %p95, %p96
      %p98 = scmp.ne.s32.totalorder %s87, %s88
      %p99 = scmp.eq.s32.totalorder %s27, 0
      %p100 = por %p98, %p99
      %p101 = scmp.ne.s32.totalorder %s87, %s88
      %p102 = scmp.eq.s32.totalorder %s28, 1
      %p103 = por %p101, %p102
      %p105 = scmp.ne.s32.totalorder %s88, %s104
      %p106 = scmp.eq.s32.totalorder %s28, 0
      %p107 = por %p105, %p106
      %s109 = sadd.s32 %s108, 1
      %p112 = scmp.eq.s32.totalorder %s22, 1
      %p113 = scmp.ne.s32.totalorder %s108, %s110
      %p114 = scmp.eq.s32.totalorder %s22, 0
      %p115 = por %p113, %p114
      %p116 = scmp.ne.s32.totalorder %s108, %s110
      %p117 = scmp.eq.s32.totalorder %s27, 1
      %p118 = por %p116, %p117
      %p119 = scmp.ne.s32.totalorder %s110, %s111
      %p120 = scmp.eq.s32.totalorder %s27, 0
      %p121 = por %p119, %p120
      %p122 = scmp.ne.s32.totalorder %s110, %s111
      %p123 = scmp.eq.s32.totalorder %s28, 1
      %p124 = por %p122, %p123
      %p126 = scmp.ne.s32.totalorder %s111, %s125
      %p127 = scmp.eq.s32.totalorder %s28, 0
      %p128 = por %p126, %p127
      %s130 = sadd.s32 %s129, 1
      %p133 = scmp.eq.s32.totalorder %s22, 1
      %p134 = scmp.ne.s32.totalorder %s129, %s131
      %p135 = scmp.eq.s32.totalorder %s22, 0
      %p136 = por %p134, %p135
      %p137 = scmp.ne.s32.totalorder %s129, %s131
      %p138 = scmp.eq.s32.totalorder %s27, 1
      %p139 = por %p137, %p138
      %p140 = scmp.ne.s32.totalorder %s131, %s132
      %p141 = scmp.eq.s32.totalorder %s27, 0
      %p142 = por %p140, %p141
      %p143 = scmp.ne.s32.totalorder %s131, %s132
      %p144 = scmp.eq.s32.totalorder %s28, 1
      %p145 = por %p143, %p144
      %p147 = scmp.ne.s32.totalorder %s132, %s146
      %p148 = scmp.eq.s32.totalorder %s28, 0
      %p149 = por %p147, %p148
      %s151 = sadd.s32 %s150, 1
      %p154 = scmp.eq.s32.totalorder %s22, 1
      %p155 = scmp.ne.s32.totalorder %s150, %s152
      %p156 = scmp.eq.s32.totalorder %s22, 0
      %p157 = por %p155, %p156
      %p158 = scmp.ne.s32.totalorder %s150, %s152
      %p159 = scmp.eq.s32.totalorder %s27, 1
      %p160 = por %p158, %p159
      %p161 = scmp.ne.s32.totalorder %s152, %s153
      %p162 = scmp.eq.s32.totalorder %s27, 0
      %p163 = por %p161, %p162
      %p164 = scmp.ne.s32.totalorder %s152, %s153
      %p165 = scmp.eq.s32.totalorder %s28, 1
      %p166 = por %p164, %p165
      %p168 = scmp.ne.s32.totalorder %s153, %s167
      %p169 = scmp.eq.s32.totalorder %s28, 0
      %p170 = por %p168, %p169
      %s171 = ssub.s32 %s22, %s29
      %p172 = scmp.eq.s32.totalorder %s171, 0
      %s174 = sadd.s32 %s173, 1
      %s175 = scalar_select %p172, %s173, %s174
      %p178 = pneg %p172
      %p179 = scmp.eq.s32.totalorder %s22, 1
      %p180 = por %p178, %p179
      %p181 = scmp.ne.s32.totalorder %s173, %s176
      %p182 = scmp.eq.s32.totalorder %s22, 0
      %p183 = por %p181, %p182
      %p184 = scmp.ne.s32.totalorder %s173, %s176
      %p185 = scmp.eq.s32.totalorder %s27, 1
      %p186 = por %p184, %p185
      %p187 = scmp.ne.s32.totalorder %s176, %s177
      %p188 = scmp.eq.s32.totalorder %s27, 0
      %p189 = por %p187, %p188
      %p190 = scmp.ne.s32.totalorder %s176, %s177
      %p191 = scmp.eq.s32.totalorder %s28, 1
      %p192 = por %p190, %p191
      %p194 = scmp.ne.s32.totalorder %s177, %s193
      %p195 = scmp.eq.s32.totalorder %s28, 0
      %p196 = por %p194, %p195
      %p197 = scmp.le.s32.totalorder 1, %s22
      %p198 = scmp.lt.s32.totalorder %s22, 3
      %p199 = pnand %p197, %p198
      %p200 = pneg %p199
      // Predicated region
      $region9: #{tpu_custom_call.1} parent=5 // pred_check
        _
      $region10: #{tpu_custom_call.1} parent=5 // pred_check_branch
        %202 = sbr.rel (%p199) target = $region12
      $region11: #{tpu_custom_call.1} parent=5 // pred_region
        %s203 = ssub.s32 %s22, 1
        // Predicated region
        $region13: #{tpu_custom_call.1} parent=11 // pred_check
          %p204 = pneg %p121
        $region14: #{tpu_custom_call.1} parent=11 // pred_check_branch
          %206 = sbr.rel (%p204) target = $region16
        $region15: #{tpu_custom_call.1} parent=11 // pred_region
          %s208 = ssub.s32 512, 512
          %209 = vsyncadd [#allocation10], %s208
          %s210 = sshll.u32 [#allocation9], 4
          %s211 = int_to_ptr.vmem [resolvable:$true] %s210
          %216 = dma.hbm_to_vmem [thread:$0]  %s3, 512, %s211, [#allocation10], 128, 128, 8
        $region16: #{tpu_custom_call.1} parent=11 // pred_fallthru
          _
        // Predicated region
        $region17: #{tpu_custom_call.1} parent=11 // pred_check
          %p217 = pneg %p142
        $region18: #{tpu_custom_call.1} parent=11 // pred_check_branch
          %219 = sbr.rel (%p217) target = $region20
        $region19: #{tpu_custom_call.1} parent=11 // pred_region
          %s221 = ssub.s32 512, 512
          %222 = vsyncadd [#allocation10], %s221
          %s223 = sshll.u32 [#allocation11], 4
          %s224 = int_to_ptr.vmem [resolvable:$true] %s223
          %229 = dma.hbm_to_vmem [thread:$0]  %s4, 512, %s224, [#allocation10], 128, 128, 8
        $region20: #{tpu_custom_call.1} parent=11 // pred_fallthru
          _
        // Predicated region
        $region21: #{tpu_custom_call.1} parent=11 // pred_check
          %p230 = pneg %p163
        $region22: #{tpu_custom_call.1} parent=11 // pred_check_branch
          %232 = sbr.rel (%p230) target = $region24
        $region23: #{tpu_custom_call.1} parent=11 // pred_region
          _
        $region24: #{tpu_custom_call.1} parent=11 // pred_fallthru
          _
      $region12: #{tpu_custom_call.1} parent=5 // pred_fallthru
        _
      %p233 = scmp.lt.s32.totalorder %s22, 2
      // Predicated region
      $region25: #{tpu_custom_call.1} parent=5 // pred_check
        %p234 = pneg %p233
      $region26: #{tpu_custom_call.1} parent=5 // pred_check_branch
        %236 = sbr.rel (%p234) target = $region28
      $region27: #{tpu_custom_call.1} parent=5 // pred_region
        // Predicated region
        $region29: #{tpu_custom_call.1} parent=27 // pred_check
          %p237 = pneg %p42
        $region30: #{tpu_custom_call.1} parent=27 // pred_check_branch
          %239 = sbr.rel (%p237) target = $region32
        $region31: #{tpu_custom_call.1} parent=27 // pred_region
          %s240 = sand.u32 %s32, 1
          %s241 = scalar_lea.sflag [#allocation4], %s240
          %s242 = sand.u32 %s32, 1
          %s243 = smul.addr %s242, 8
          %s244 = scalar_lea.vmem [#allocation3], %s243
          %s246 = ssub.s32 128, 128
          %247 = vsyncadd %s241, %s246
          %s248 = smul.addr %s22, 128
          %s249 = scalar_lea.hbm %s0, %s248
          %s251 = sshll.u32 %s244, 4
          %s252 = int_to_ptr.vmem [resolvable:$true] %s251
          %254 = dma.hbm_to_vmem [thread:$0]  %s249, 128, %s252, %s241
        $region32: #{tpu_custom_call.1} parent=27 // pred_fallthru
          _
        // Predicated region
        $region33: #{tpu_custom_call.1} parent=27 // pred_check
          %p255 = pneg %p68
        $region34: #{tpu_custom_call.1} parent=27 // pred_check_branch
          %257 = sbr.rel (%p255) target = $region36
        $region35: #{tpu_custom_call.1} parent=27 // pred_region
          %s258 = sand.u32 %s22, 1
          %s259 = scalar_lea.sflag [#allocation7], %s258
          %s260 = sand.u32 %s58, 1
          %s261 = smul.addr %s260, 8
          %s262 = scalar_lea.vmem [#allocation6], %s261
          %s264 = ssub.s32 128, 128
          %265 = vsyncadd %s259, %s264
          %s266 = smul.addr %s22, 128
          %s267 = scalar_lea.hbm %s1, %s266
          %s269 = sshll.u32 %s262, 4
          %s270 = int_to_ptr.vmem [resolvable:$true] %s269
          %272 = dma.hbm_to_vmem [thread:$0]  %s267, 128, %s270, %s259
        $region36: #{tpu_custom_call.1} parent=27 // pred_fallthru
          _
        // Predicated region
        $region37: #{tpu_custom_call.1} parent=27 // pred_check
          %p273 = pneg %p94
        $region38: #{tpu_custom_call.1} parent=27 // pred_check_branch
          %275 = sbr.rel (%p273) target = $region40
        $region39: #{tpu_custom_call.1} parent=27 // pred_region
          %s276 = sand.u32 %s22, 1
          %s277 = scalar_lea.sflag [#allocation7], %s276
          %s278 = sand.u32 %s84, 1
          %s279 = smul.addr %s278, 8
          %s280 = scalar_lea.vmem [#allocation8], %s279
          %s282 = ssub.s32 128, 128
          %283 = vsyncadd %s277, %s282
          %s284 = smul.addr %s22, 128
          %s285 = scalar_lea.hbm %s2, %s284
          %s287 = sshll.u32 %s280, 4
          %s288 = int_to_ptr.vmem [resolvable:$true] %s287
          %290 = dma.hbm_to_vmem [thread:$0]  %s285, 128, %s288, %s277
        $region40: #{tpu_custom_call.1} parent=27 // pred_fallthru
          _
      $region28: #{tpu_custom_call.1} parent=5 // pred_fallthru
        _
      %p291 = scmp.le.s32.totalorder 1, %s22
      %p292 = scmp.lt.s32.totalorder %s22, 3
      %p293 = pnand %p291, %p292
      %p294 = pneg %p293
      // Predicated region
      $region41: #{tpu_custom_call.1} parent=5 // pred_check
        _
      $region42: #{tpu_custom_call.1} parent=5 // pred_check_branch
        %296 = sbr.rel (%p293) target = $region44
      $region43: #{tpu_custom_call.1} parent=5 // pred_region
        %s297 = ssub.s32 %s22, 1
        %s298 = sand.u32 %s35, 1
        %s299 = scalar_lea.sflag [#allocation4], %s298
        %s300 = sand.u32 %s35, 1
        %s301 = smul.addr %s300, 8
        %s302 = scalar_lea.vmem [#allocation3], %s301
        // Predicated region
        $region45: #{tpu_custom_call.1} parent=43 // pred_check
          %p303 = pneg %p48
        $region46: #{tpu_custom_call.1} parent=43 // pred_check_branch
          %305 = sbr.rel (%p303) target = $region48
        $region47: #{tpu_custom_call.1} parent=43 // pred_region
          %306 = dma.done %s299, 128
        $region48: #{tpu_custom_call.1} parent=43 // pred_fallthru
          _
        %s307 = sand.u32 %s27, 1
        %s308 = scalar_lea.sflag [#allocation7], %s307
        %s309 = sand.u32 %s61, 1
        %s310 = smul.addr %s309, 8
        %s311 = scalar_lea.vmem [#allocation6], %s310
        // Predicated region
        $region49: #{tpu_custom_call.1} parent=43 // pred_check
          %p312 = pneg %p74
        $region50: #{tpu_custom_call.1} parent=43 // pred_check_branch
          %314 = sbr.rel (%p312) target = $region52
        $region51: #{tpu_custom_call.1} parent=43 // pred_region
          %315 = dma.done %s308, 128
        $region52: #{tpu_custom_call.1} parent=43 // pred_fallthru
          _
        %s316 = sand.u32 %s27, 1
        %s317 = scalar_lea.sflag [#allocation7], %s316
        %s318 = sand.u32 %s87, 1
        %s319 = smul.addr %s318, 8
        %s320 = scalar_lea.vmem [#allocation8], %s319
        // Predicated region
        $region53: #{tpu_custom_call.1} parent=43 // pred_check
          %p321 = pneg %p100
        $region54: #{tpu_custom_call.1} parent=43 // pred_check_branch
          %323 = sbr.rel (%p321) target = $region56
        $region55: #{tpu_custom_call.1} parent=43 // pred_region
          %324 = dma.done %s317, 128
        $region56: #{tpu_custom_call.1} parent=43 // pred_fallthru
          _
        // Predicated region
        $region57: #{tpu_custom_call.1} parent=43 // pred_check
          %p325 = pneg %p121
        $region58: #{tpu_custom_call.1} parent=43 // pred_check_branch
          %327 = sbr.rel (%p325) target = $region60
        $region59: #{tpu_custom_call.1} parent=43 // pred_region
          %328 = dma.done [#allocation10], 512
        $region60: #{tpu_custom_call.1} parent=43 // pred_fallthru
          _
        // Predicated region
        $region61: #{tpu_custom_call.1} parent=43 // pred_check
          %p329 = pneg %p142
        $region62: #{tpu_custom_call.1} parent=43 // pred_check_branch
          %331 = sbr.rel (%p329) target = $region64
        $region63: #{tpu_custom_call.1} parent=43 // pred_region
          %332 = dma.done [#allocation10], 512
        $region64: #{tpu_custom_call.1} parent=43 // pred_fallthru
          _
        %s333 = sand.u32 %s35, 1
        %s334 = scalar_lea.sflag [#allocation4], %s333
        %s335 = sand.u32 %s35, 1
        %s336 = smul.addr %s335, 8
        %s337 = scalar_lea.vmem [#allocation3], %s336
        %p338 = pneg %p48
        %p339 = pneg %p45
        %s340 = sand.u32 %s27, 1
        %s341 = scalar_lea.sflag [#allocation7], %s340
        %s342 = sand.u32 %s61, 1
        %s343 = smul.addr %s342, 8
        %s344 = scalar_lea.vmem [#allocation6], %s343
        %p345 = pneg %p74
        %p346 = pneg %p71
        %s347 = sand.u32 %s27, 1
        %s348 = scalar_lea.sflag [#allocation7], %s347
        %s349 = sand.u32 %s87, 1
        %s350 = smul.addr %s349, 8
        %s351 = scalar_lea.vmem [#allocation8], %s350
        %p352 = pneg %p100
        %p353 = pneg %p97
        %p354 = pneg %p121
        %p355 = pneg %p118
        %p356 = pneg %p142
        %p357 = pneg %p139
        %p358 = pneg %p163
        %p359 = pneg %p160
        %p360 = pneg %p189
        %p361 = pneg %p186
        %s362 = sand.u32 %s176, 1
        %s363 = scalar_lea.sflag [#allocation5], %s362
        %s364 = sand.u32 %s176, 1
        %s365 = smul.addr %s364, 8
        %s366 = scalar_lea.vmem [#allocation12], %s365
        %v367 = vld [vmem:[%s302] sm:$0xff]
        %v368 = vld [vmem:[%s311] sm:$0xff]
        %v369 = vld [vmem:[%s320] sm:$0xff]
        %v370 = vld [vmem:[#allocation9] sm:$0xff]
        %v371 = vld [vmem:[#allocation9 + $0x8] sm:$0xff]
        %v372 = vld [vmem:[#allocation9 + $0x10] sm:$0xff]
        %v373 = vld [vmem:[#allocation9 + $0x18] sm:$0xff]
        %vm374 = vcmask 261120
        %v376 = vsel %vm374, %v367, 0
        %378 = vmatprep.subr.mxu0 0.0
        %379 = vmatpush1.msra.mxu0 %v370
        %380 = vmatprep.subr.mxu0 0.0
        %381 = vmatpush1.msra.mxu0 %v371
        %382 = vmatprep.subr.mxu0 0.0
        %383 = vmatpush1.msra.mxu0 %v372
        %384 = vmatprep.subr.mxu0 0.0
        %385 = vmatpush1.msra.mxu0 %v373
        %386 = vmatprep.subr.mxu0 0.0
        %387 = vmatpush1.msra.mxu0 0.0
        %388 = vmatprep.subr.mxu0 0.0
        %389 = vmatpush1.msra.mxu0 0.0
        %390 = vmatprep.subr.mxu0 0.0
        %391 = vmatpush1.msra.mxu0 0.0
        %392 = vmatprep.subr.mxu0 0.0
        %393 = vmatpush1.msra.mxu0 0.0
        %394 = vmatprep.subr.mxu0 0.0
        %395 = vmatpush1.msra.mxu0 0.0
        %396 = vmatprep.subr.mxu0 0.0
        %397 = vmatpush1.msra.mxu0 0.0
        %398 = vmatprep.subr.mxu0 0.0
        %399 = vmatpush1.msra.mxu0 0.0
        %400 = vmatprep.subr.mxu0 0.0
        %401 = vmatpush1.msra.mxu0 0.0
        %402 = vmatprep.subr.mxu0 0.0
        %403 = vmatpush1.msra.mxu0 0.0
        %404 = vmatprep.subr.mxu0 0.0
        %405 = vmatpush1.msra.mxu0 0.0
        %406 = vmatprep.subr.mxu0 0.0
        %407 = vmatpush1.msra.mxu0 0.0
        %408 = vmatprep.subr.mxu0 0.0
        %409 = vmatpush1.msra.mxu0 0.0
        %410 = vmatprep.subr.mxu0 0.0
        %411 = vmatpush1.msra.mxu0 0.0
        %412 = vmatprep.subr.mxu0 0.0
        %413 = vmatpush1.msra.mxu0 0.0
        %414 = vmatprep.subr.mxu0 0.0
        %415 = vmatpush1.msra.mxu0 0.0
        %416 = vmatprep.subr.mxu0 0.0
        %417 = vmatpush1.msra.mxu0 0.0
        %418 = vmatprep.subr.mxu0 0.0
        %419 = vmatpush1.msra.mxu0 0.0
        %420 = vmatprep.subr.mxu0 0.0
        %421 = vmatpush1.msra.mxu0 0.0
        %422 = vmatprep.subr.mxu0 0.0
        %423 = vmatpush1.msra.mxu0 0.0
        %424 = vmatprep.subr.mxu0 0.0
        %425 = vmatpush1.msra.mxu0 0.0
        %426 = vmatprep.subr.mxu0 0.0
        %427 = vmatpush1.msra.mxu0 0.0
        %428 = vmatprep.subr.mxu0 0.0
        %429 = vmatpush1.msra.mxu0 0.0
        %430 = vmatprep.subr.mxu0 0.0
        %431 = vmatpush1.msra.mxu0 0.0
        %432 = vmatprep.subr.mxu0 0.0
        %433 = vmatpush1.msra.mxu0 0.0
        %434 = vmatprep.subr.mxu0 0.0
        %435 = vmatpush1.msra.mxu0 0.0
        %436 = vmatprep.subr.mxu0 0.0
        %437 = vmatpush1.msra.mxu0 0.0
        %438 = vmatprep.subr.mxu0 0.0
        %439 = vmatpush1.msra.mxu0 0.0
        %440 = vmatprep.subr.mxu0 0.0
        %441 = vmatpush1.msra.mxu0 0.0
        %442 = vmatprep.mubr.f32.mxu0 0.0
        %443 = vmatmul.mubr.f32.gmra.mrb[0].mxu0 %v376
        %v444 = vpop.f32.mrb[0].mxu0
        %v445 = vadd.f32 0.0, %v444
        %v446 = vpop.f32.mrb[0].mxu0
        %447 = vdwg.mxu0
        %v448 = vmul.f32 %v445, 0.35355338
        %453 = vrot.lane.b32.xlu0 %v370, 96
        %v454 = vpop.permute.xlu0 %453
        %455 = vrot.lane.b32.xlu0 %v371, 96
        %v456 = vpop.permute.xlu0 %455
        %457 = vrot.lane.b32.xlu0 %v372, 96
        %v458 = vpop.permute.xlu0 %457
        %459 = vrot.lane.b32.xlu0 %v373, 96
        %v460 = vpop.permute.xlu0 %459
        %v466 = vsel %vm374, %v368, 0
        %468 = vmatprep.subr.mxu0 0.0
        %469 = vmatpush1.msra.mxu0 %v454
        %470 = vmatprep.subr.mxu0 0.0
        %471 = vmatpush1.msra.mxu0 %v456
        %472 = vmatprep.subr.mxu0 0.0
        %473 = vmatpush1.msra.mxu0 %v458
        %474 = vmatprep.subr.mxu0 0.0
        %475 = vmatpush1.msra.mxu0 %v460
        %476 = vmatprep.subr.mxu0 0.0
        %477 = vmatpush1.msra.mxu0 0.0
        %478 = vmatprep.subr.mxu0 0.0
        %479 = vmatpush1.msra.mxu0 0.0
        %480 = vmatprep.subr.mxu0 0.0
        %481 = vmatpush1.msra.mxu0 0.0
        %482 = vmatprep.subr.mxu0 0.0
        %483 = vmatpush1.msra.mxu0 0.0
        %484 = vmatprep.subr.mxu0 0.0
        %485 = vmatpush1.msra.mxu0 0.0
        %486 = vmatprep.subr.mxu0 0.0
        %487 = vmatpush1.msra.mxu0 0.0
        %488 = vmatprep.subr.mxu0 0.0
        %489 = vmatpush1.msra.mxu0 0.0
        %490 = vmatprep.subr.mxu0 0.0
        %491 = vmatpush1.msra.mxu0 0.0
        %492 = vmatprep.subr.mxu0 0.0
        %493 = vmatpush1.msra.mxu0 0.0
        %494 = vmatprep.subr.mxu0 0.0
        %495 = vmatpush1.msra.mxu0 0.0
        %496 = vmatprep.subr.mxu0 0.0
        %497 = vmatpush1.msra.mxu0 0.0
        %498 = vmatprep.subr.mxu0 0.0
        %499 = vmatpush1.msra.mxu0 0.0
        %500 = vmatprep.subr.mxu0 0.0
        %501 = vmatpush1.msra.mxu0 0.0
        %502 = vmatprep.subr.mxu0 0.0
        %503 = vmatpush1.msra.mxu0 0.0
        %504 = vmatprep.subr.mxu0 0.0
        %505 = vmatpush1.msra.mxu0 0.0
        %506 = vmatprep.subr.mxu0 0.0
        %507 = vmatpush1.msra.mxu0 0.0
        %508 = vmatprep.subr.mxu0 0.0
        %509 = vmatpush1.msra.mxu0 0.0
        %510 = vmatprep.subr.mxu0 0.0
        %511 = vmatpush1.msra.mxu0 0.0
        %512 = vmatprep.subr.mxu0 0.0
        %513 = vmatpush1.msra.mxu0 0.0
        %514 = vmatprep.subr.mxu0 0.0
        %515 = vmatpush1.msra.mxu0 0.0
        %516 = vmatprep.subr.mxu0 0.0
        %517 = vmatpush1.msra.mxu0 0.0
        %518 = vmatprep.subr.mxu0 0.0
        %519 = vmatpush1.msra.mxu0 0.0
        %520 = vmatprep.subr.mxu0 0.0
        %521 = vmatpush1.msra.mxu0 0.0
        %522 = vmatprep.subr.mxu0 0.0
        %523 = vmatpush1.msra.mxu0 0.0
        %524 = vmatprep.subr.mxu0 0.0
        %525 = vmatpush1.msra.mxu0 0.0
        %526 = vmatprep.subr.mxu0 0.0
        %527 = vmatpush1.msra.mxu0 0.0
        %528 = vmatprep.subr.mxu0 0.0
        %529 = vmatpush1.msra.mxu0 0.0
        %530 = vmatprep.subr.mxu0 0.0
        %531 = vmatpush1.msra.mxu0 0.0
        %532 = vmatprep.mubr.f32.mxu0 0.0
        %533 = vmatmul.mubr.f32.gmra.mrb[0].mxu0 %v466
        %v534 = vpop.f32.mrb[0].mxu0
        %v535 = vadd.f32 0.0, %v534
        %v536 = vpop.f32.mrb[0].mxu0
        %537 = vdwg.mxu0
        %538 = vrot.lane.b32.xlu0 %v370, 64
        %v539 = vpop.permute.xlu0 %538
        %540 = vrot.lane.b32.xlu0 %v371, 64
        %v541 = vpop.permute.xlu0 %540
        %542 = vrot.lane.b32.xlu0 %v372, 64
        %v543 = vpop.permute.xlu0 %542
        %544 = vrot.lane.b32.xlu0 %v373, 64
        %v545 = vpop.permute.xlu0 %544
        %v551 = vsel %vm374, %v369, 0
        %553 = vmatprep.subr.mxu0 0.0
        %554 = vmatpush1.msra.mxu0 %v539
        %555 = vmatprep.subr.mxu0 0.0
        %556 = vmatpush1.msra.mxu0 %v541
        %557 = vmatprep.subr.mxu0 0.0
        %558 = vmatpush1.msra.mxu0 %v543
        %559 = vmatprep.subr.mxu0 0.0
        %560 = vmatpush1.msra.mxu0 %v545
        %561 = vmatprep.subr.mxu0 0.0
        %562 = vmatpush1.msra.mxu0 0.0
        %563 = vmatprep.subr.mxu0 0.0
        %564 = vmatpush1.msra.mxu0 0.0
        %565 = vmatprep.subr.mxu0 0.0
        %566 = vmatpush1.msra.mxu0 0.0
        %567 = vmatprep.subr.mxu0 0.0
        %568 = vmatpush1.msra.mxu0 0.0
        %569 = vmatprep.subr.mxu0 0.0
        %570 = vmatpush1.msra.mxu0 0.0
        %571 = vmatprep.subr.mxu0 0.0
        %572 = vmatpush1.msra.mxu0 0.0
        %573 = vmatprep.subr.mxu0 0.0
        %574 = vmatpush1.msra.mxu0 0.0
        %575 = vmatprep.subr.mxu0 0.0
        %576 = vmatpush1.msra.mxu0 0.0
        %577 = vmatprep.subr.mxu0 0.0
        %578 = vmatpush1.msra.mxu0 0.0
        %579 = vmatprep.subr.mxu0 0.0
        %580 = vmatpush1.msra.mxu0 0.0
        %581 = vmatprep.subr.mxu0 0.0
        %582 = vmatpush1.msra.mxu0 0.0
        %583 = vmatprep.subr.mxu0 0.0
        %584 = vmatpush1.msra.mxu0 0.0
        %585 = vmatprep.subr.mxu0 0.0
        %586 = vmatpush1.msra.mxu0 0.0
        %587 = vmatprep.subr.mxu0 0.0
        %588 = vmatpush1.msra.mxu0 0.0
        %589 = vmatprep.subr.mxu0 0.0
        %590 = vmatpush1.msra.mxu0 0.0
        %591 = vmatprep.subr.mxu0 0.0
        %592 = vmatpush1.msra.mxu0 0.0
        %593 = vmatprep.subr.mxu0 0.0
        %594 = vmatpush1.msra.mxu0 0.0
        %595 = vmatprep.subr.mxu0 0.0
        %596 = vmatpush1.msra.mxu0 0.0
        %597 = vmatprep.subr.mxu0 0.0
        %598 = vmatpush1.msra.mxu0 0.0
        %599 = vmatprep.subr.mxu0 0.0
        %600 = vmatpush1.msra.mxu0 0.0
        %601 = vmatprep.subr.mxu0 0.0
        %602 = vmatpush1.msra.mxu0 0.0
        %603 = vmatprep.subr.mxu0 0.0
        %604 = vmatpush1.msra.mxu0 0.0
        %605 = vmatprep.subr.mxu0 0.0
        %606 = vmatpush1.msra.mxu0 0.0
        %607 = vmatprep.subr.mxu0 0.0
        %608 = vmatpush1.msra.mxu0 0.0
        %609 = vmatprep.subr.mxu0 0.0
        %610 = vmatpush1.msra.mxu0 0.0
        %611 = vmatprep.subr.mxu0 0.0
        %612 = vmatpush1.msra.mxu0 0.0
        %613 = vmatprep.subr.mxu0 0.0
        %614 = vmatpush1.msra.mxu0 0.0
        %615 = vmatprep.subr.mxu0 0.0
        %616 = vmatpush1.msra.mxu0 0.0
        %617 = vmatprep.mubr.f32.mxu0 0.0
        %618 = vmatmul.mubr.f32.gmra.mrb[0].mxu0 %v551
        %v619 = vpop.f32.mrb[0].mxu0
        %v620 = vadd.f32 0.0, %v619
        %v621 = vpop.f32.mrb[0].mxu0
        %622 = vdwg.mxu0
        %vm623 = vcmask 64512
        %v625 = vsel %vm623, %v448, 0
        %v628 = vsel %vm623, %v535, 0
        %630 = vmatprep.subr.mxu0 0.0
        %631 = vmatpush1.xpose.msra.mxu0 %v628
        %632 = vmatprep.subr.mxu0 0.0
        %633 = vmatpush1.xpose.msra.mxu0 0.0
        %634 = vmatprep.subr.mxu0 0.0
        %635 = vmatpush1.xpose.msra.mxu0 0.0
        %636 = vmatprep.subr.mxu0 0.0
        %637 = vmatpush1.xpose.msra.mxu0 0.0
        %638 = vmatprep.subr.mxu0 0.0
        %639 = vmatpush1.xpose.msra.mxu0 0.0
        %640 = vmatprep.subr.mxu0 0.0
        %641 = vmatpush1.xpose.msra.mxu0 0.0
        %642 = vmatprep.subr.mxu0 0.0
        %643 = vmatpush1.xpose.msra.mxu0 0.0
        %644 = vmatprep.subr.mxu0 0.0
        %645 = vmatpush1.xpose.msra.mxu0 0.0
        %646 = vmatprep.subr.mxu0 0.0
        %647 = vmatpush1.xpose.msra.mxu0 0.0
        %648 = vmatprep.subr.mxu0 0.0
        %649 = vmatpush1.xpose.msra.mxu0 0.0
        %650 = vmatprep.subr.mxu0 0.0
        %651 = vmatpush1.xpose.msra.mxu0 0.0
        %652 = vmatprep.subr.mxu0 0.0
        %653 = vmatpush1.xpose.msra.mxu0 0.0
        %654 = vmatprep.subr.mxu0 0.0
        %655 = vmatpush1.xpose.msra.mxu0 0.0
        %656 = vmatprep.subr.mxu0 0.0
        %657 = vmatpush1.xpose.msra.mxu0 0.0
        %658 = vmatprep.subr.mxu0 0.0
        %659 = vmatpush1.xpose.msra.mxu0 0.0
        %660 = vmatprep.subr.mxu0 0.0
        %661 = vmatpush1.xpose.msra.mxu0 0.0
        %662 = vmatprep.subr.mxu0 0.0
        %663 = vmatpush1.xpose.msra.mxu0 0.0
        %664 = vmatprep.subr.mxu0 0.0
        %665 = vmatpush1.xpose.msra.mxu0 0.0
        %666 = vmatprep.subr.mxu0 0.0
        %667 = vmatpush1.xpose.msra.mxu0 0.0
        %668 = vmatprep.subr.mxu0 0.0
        %669 = vmatpush1.xpose.msra.mxu0 0.0
        %670 = vmatprep.subr.mxu0 0.0
        %671 = vmatpush1.xpose.msra.mxu0 0.0
        %672 = vmatprep.subr.mxu0 0.0
        %673 = vmatpush1.xpose.msra.mxu0 0.0
        %674 = vmatprep.subr.mxu0 0.0
        %675 = vmatpush1.xpose.msra.mxu0 0.0
        %676 = vmatprep.subr.mxu0 0.0
        %677 = vmatpush1.xpose.msra.mxu0 0.0
        %678 = vmatprep.subr.mxu0 0.0
        %679 = vmatpush1.xpose.msra.mxu0 0.0
        %680 = vmatprep.subr.mxu0 0.0
        %681 = vmatpush1.xpose.msra.mxu0 0.0
        %682 = vmatprep.subr.mxu0 0.0
        %683 = vmatpush1.xpose.msra.mxu0 0.0
        %684 = vmatprep.subr.mxu0 0.0
        %685 = vmatpush1.xpose.msra.mxu0 0.0
        %686 = vmatprep.subr.mxu0 0.0
        %687 = vmatpush1.xpose.msra.mxu0 0.0
        %688 = vmatprep.subr.mxu0 0.0
        %689 = vmatpush1.xpose.msra.mxu0 0.0
        %690 = vmatprep.subr.mxu0 0.0
        %691 = vmatpush1.xpose.msra.mxu0 0.0
        %692 = vmatprep.subr.mxu0 0.0
        %693 = vmatpush1.xpose.msra.mxu0 0.0
        %694 = vmatprep.mubr.f32.mxu0 0.0
        %695 = vmatmul.mubr.f32.gmra.mrb[0].mxu0 %v625
        %v696 = vpop.f32.mrb[0].mxu0
        %v697 = vadd.f32 0.0, %v696
        %v698 = vpop.f32.mrb[0].mxu0
        %699 = vdwg.mxu0
        %v700 = vsel %vm623, %v697, -inf
        %701 = vmax.xlane.f32.xlu0 %v700
        %v702 = vpop.xlane.xlu0 %701
        %v703 = vsub.f32 %v697, %v702
        %v704 = vmul.f32 %v703, 1.442695
        %v705 = vpow.pop %v704
        %v706 = vsel %vm623, %v705, 0.0
        %707 = vadd.xlane.f32.xlu0 %v706
        %v708 = vpop.xlane.xlu0 %707
        %v709 = vrcp.pop %v708
        %v710 = vmul.f32 %v705, %v709
        %v712 = vsel %vm623, %v710, 0
        %714 = vmatprep.subr.mxu0 0.0
        %715 = vmatpush1.msra.mxu0 %v620
        %716 = vmatprep.subr.mxu0 0.0
        %717 = vmatpush1.msra.mxu0 0.0
        %718 = vmatprep.subr.mxu0 0.0
        %719 = vmatpush1.msra.mxu0 0.0
        %720 = vmatprep.subr.mxu0 0.0
        %721 = vmatpush1.msra.mxu0 0.0
        %722 = vmatprep.subr.mxu0 0.0
        %723 = vmatpush1.msra.mxu0 0.0
        %724 = vmatprep.subr.mxu0 0.0
        %725 = vmatpush1.msra.mxu0 0.0
        %726 = vmatprep.subr.mxu0 0.0
        %727 = vmatpush1.msra.mxu0 0.0
        %728 = vmatprep.subr.mxu0 0.0
        %729 = vmatpush1.msra.mxu0 0.0
        %730 = vmatprep.subr.mxu0 0.0
        %731 = vmatpush1.msra.mxu0 0.0
        %732 = vmatprep.subr.mxu0 0.0
        %733 = vmatpush1.msra.mxu0 0.0
        %734 = vmatprep.subr.mxu0 0.0
        %735 = vmatpush1.msra.mxu0 0.0
        %736 = vmatprep.subr.mxu0 0.0
        %737 = vmatpush1.msra.mxu0 0.0
        %738 = vmatprep.subr.mxu0 0.0
        %739 = vmatpush1.msra.mxu0 0.0
        %740 = vmatprep.subr.mxu0 0.0
        %741 = vmatpush1.msra.mxu0 0.0
        %742 = vmatprep.subr.mxu0 0.0
        %743 = vmatpush1.msra.mxu0 0.0
        %744 = vmatprep.subr.mxu0 0.0
        %745 = vmatpush1.msra.mxu0 0.0
        %746 = vmatprep.subr.mxu0 0.0
        %747 = vmatpush1.msra.mxu0 0.0
        %748 = vmatprep.subr.mxu0 0.0
        %749 = vmatpush1.msra.mxu0 0.0
        %750 = vmatprep.subr.mxu0 0.0
        %751 = vmatpush1.msra.mxu0 0.0
        %752 = vmatprep.subr.mxu0 0.0
        %753 = vmatpush1.msra.mxu0 0.0
        %754 = vmatprep.subr.mxu0 0.0
        %755 = vmatpush1.msra.mxu0 0.0
        %756 = vmatprep.subr.mxu0 0.0
        %757 = vmatpush1.msra.mxu0 0.0
        %758 = vmatprep.subr.mxu0 0.0
        %759 = vmatpush1.msra.mxu0 0.0
        %760 = vmatprep.subr.mxu0 0.0
        %761 = vmatpush1.msra.mxu0 0.0
        %762 = vmatprep.subr.mxu0 0.0
        %763 = vmatpush1.msra.mxu0 0.0
        %764 = vmatprep.subr.mxu0 0.0
        %765 = vmatpush1.msra.mxu0 0.0
        %766 = vmatprep.subr.mxu0 0.0
        %767 = vmatpush1.msra.mxu0 0.0
        %768 = vmatprep.subr.mxu0 0.0
        %769 = vmatpush1.msra.mxu0 0.0
        %770 = vmatprep.subr.mxu0 0.0
        %771 = vmatpush1.msra.mxu0 0.0
        %772 = vmatprep.subr.mxu0 0.0
        %773 = vmatpush1.msra.mxu0 0.0
        %774 = vmatprep.subr.mxu0 0.0
        %775 = vmatpush1.msra.mxu0 0.0
        %776 = vmatprep.subr.mxu0 0.0
        %777 = vmatpush1.msra.mxu0 0.0
        %778 = vmatprep.mubr.f32.mxu0 0.0
        %779 = vmatmul.mubr.f32.gmra.mrb[0].mxu0 %v712
        %v780 = vpop.f32.mrb[0].mxu0
        %v781 = vadd.f32 0.0, %v780
        %v782 = vpop.f32.mrb[0].mxu0
        %783 = vdwg.mxu0
        %784 = vst.msk [vmem:[#allocation2] sm:$0xff] %vm623, %v781
        %785 = vrot.lane.b32.xlu0 %v448, 120
        %v786 = vpop.permute.xlu0 %785
        %787 = vrot.lane.b32.xlu0 %v535, 120
        %v788 = vpop.permute.xlu0 %787
        %v789 = vsel %vm623, %v786, 0
        %v791 = vsel %vm623, %v788, 0
        %793 = vmatprep.subr.mxu0 0.0
        %794 = vmatpush1.xpose.msra.mxu0 %v791
        %795 = vmatprep.subr.mxu0 0.0
        %796 = vmatpush1.xpose.msra.mxu0 0.0
        %797 = vmatprep.subr.mxu0 0.0
        %798 = vmatpush1.xpose.msra.mxu0 0.0
        %799 = vmatprep.subr.mxu0 0.0
        %800 = vmatpush1.xpose.msra.mxu0 0.0
        %801 = vmatprep.subr.mxu0 0.0
        %802 = vmatpush1.xpose.msra.mxu0 0.0
        %803 = vmatprep.subr.mxu0 0.0
        %804 = vmatpush1.xpose.msra.mxu0 0.0
        %805 = vmatprep.subr.mxu0 0.0
        %806 = vmatpush1.xpose.msra.mxu0 0.0
        %807 = vmatprep.subr.mxu0 0.0
        %808 = vmatpush1.xpose.msra.mxu0 0.0
        %809 = vmatprep.subr.mxu0 0.0
        %810 = vmatpush1.xpose.msra.mxu0 0.0
        %811 = vmatprep.subr.mxu0 0.0
        %812 = vmatpush1.xpose.msra.mxu0 0.0
        %813 = vmatprep.subr.mxu0 0.0
        %814 = vmatpush1.xpose.msra.mxu0 0.0
        %815 = vmatprep.subr.mxu0 0.0
        %816 = vmatpush1.xpose.msra.mxu0 0.0
        %817 = vmatprep.subr.mxu0 0.0
        %818 = vmatpush1.xpose.msra.mxu0 0.0
        %819 = vmatprep.subr.mxu0 0.0
        %820 = vmatpush1.xpose.msra.mxu0 0.0
        %821 = vmatprep.subr.mxu0 0.0
        %822 = vmatpush1.xpose.msra.mxu0 0.0
        %823 = vmatprep.subr.mxu0 0.0
        %824 = vmatpush1.xpose.msra.mxu0 0.0
        %825 = vmatprep.subr.mxu0 0.0
        %826 = vmatpush1.xpose.msra.mxu0 0.0
        %827 = vmatprep.subr.mxu0 0.0
        %828 = vmatpush1.xpose.msra.mxu0 0.0
        %829 = vmatprep.subr.mxu0 0.0
        %830 = vmatpush1.xpose.msra.mxu0 0.0
        %831 = vmatprep.subr.mxu0 0.0
        %832 = vmatpush1.xpose.msra.mxu0 0.0
        %833 = vmatprep.subr.mxu0 0.0
        %834 = vmatpush1.xpose.msra.mxu0 0.0
        %835 = vmatprep.subr.mxu0 0.0
        %836 = vmatpush1.xpose.msra.mxu0 0.0
        %837 = vmatprep.subr.mxu0 0.0
        %838 = vmatpush1.xpose.msra.mxu0 0.0
        %839 = vmatprep.subr.mxu0 0.0
        %840 = vmatpush1.xpose.msra.mxu0 0.0
        %841 = vmatprep.subr.mxu0 0.0
        %842 = vmatpush1.xpose.msra.mxu0 0.0
        %843 = vmatprep.subr.mxu0 0.0
        %844 = vmatpush1.xpose.msra.mxu0 0.0
        %845 = vmatprep.subr.mxu0 0.0
        %846 = vmatpush1.xpose.msra.mxu0 0.0
        %847 = vmatprep.subr.mxu0 0.0
        %848 = vmatpush1.xpose.msra.mxu0 0.0
        %849 = vmatprep.subr.mxu0 0.0
        %850 = vmatpush1.xpose.msra.mxu0 0.0
        %851 = vmatprep.subr.mxu0 0.0
        %852 = vmatpush1.xpose.msra.mxu0 0.0
        %853 = vmatprep.subr.mxu0 0.0
        %854 = vmatpush1.xpose.msra.mxu0 0.0
        %855 = vmatprep.subr.mxu0 0.0
        %856 = vmatpush1.xpose.msra.mxu0 0.0
        %857 = vmatprep.mubr.f32.mxu0 0.0
        %858 = vmatmul.mubr.f32.gmra.mrb[0].mxu0 %v789
        %v859 = vpop.f32.mrb[0].mxu0
        %v860 = vadd.f32 0.0, %v859
        %v861 = vpop.f32.mrb[0].mxu0
        %862 = vdwg.mxu0
        %v863 = vsel %vm623, %v860, -inf
        %864 = vmax.xlane.f32.xlu0 %v863
        %v865 = vpop.xlane.xlu0 %864
        %v866 = vsub.f32 %v860, %v865
        %v867 = vmul.f32 %v866, 1.442695
        %v868 = vpow.pop %v867
        %v869 = vsel %vm623, %v868, 0.0
        %870 = vadd.xlane.f32.xlu0 %v869
        %v871 = vpop.xlane.xlu0 %870
        %v872 = vrcp.pop %v871
        %v873 = vmul.f32 %v868, %v872
        %875 = vrot.lane.b32.xlu0 %v620, 120
        %v876 = vpop.permute.xlu0 %875
        %v879 = vsel %vm623, %v873, 0
        %881 = vmatprep.subr.mxu0 0.0
        %882 = vmatpush1.msra.mxu0 %v876
        %883 = vmatprep.subr.mxu0 0.0
        %884 = vmatpush1.msra.mxu0 0.0
        %885 = vmatprep.subr.mxu0 0.0
        %886 = vmatpush1.msra.mxu0 0.0
        %887 = vmatprep.subr.mxu0 0.0
        %888 = vmatpush1.msra.mxu0 0.0
        %889 = vmatprep.subr.mxu0 0.0
        %890 = vmatpush1.msra.mxu0 0.0
        %891 = vmatprep.subr.mxu0 0.0
        %892 = vmatpush1.msra.mxu0 0.0
        %893 = vmatprep.subr.mxu0 0.0
        %894 = vmatpush1.msra.mxu0 0.0
        %895 = vmatprep.subr.mxu0 0.0
        %896 = vmatpush1.msra.mxu0 0.0
        %897 = vmatprep.subr.mxu0 0.0
        %898 = vmatpush1.msra.mxu0 0.0
        %899 = vmatprep.subr.mxu0 0.0
        %900 = vmatpush1.msra.mxu0 0.0
        %901 = vmatprep.subr.mxu0 0.0
        %902 = vmatpush1.msra.mxu0 0.0
        %903 = vmatprep.subr.mxu0 0.0
        %904 = vmatpush1.msra.mxu0 0.0
        %905 = vmatprep.subr.mxu0 0.0
        %906 = vmatpush1.msra.mxu0 0.0
        %907 = vmatprep.subr.mxu0 0.0
        %908 = vmatpush1.msra.mxu0 0.0
        %909 = vmatprep.subr.mxu0 0.0
        %910 = vmatpush1.msra.mxu0 0.0
        %911 = vmatprep.subr.mxu0 0.0
        %912 = vmatpush1.msra.mxu0 0.0
        %913 = vmatprep.subr.mxu0 0.0
        %914 = vmatpush1.msra.mxu0 0.0
        %915 = vmatprep.subr.mxu0 0.0
        %916 = vmatpush1.msra.mxu0 0.0
        %917 = vmatprep.subr.mxu0 0.0
        %918 = vmatpush1.msra.mxu0 0.0
        %919 = vmatprep.subr.mxu0 0.0
        %920 = vmatpush1.msra.mxu0 0.0
        %921 = vmatprep.subr.mxu0 0.0
        %922 = vmatpush1.msra.mxu0 0.0
        %923 = vmatprep.subr.mxu0 0.0
        %924 = vmatpush1.msra.mxu0 0.0
        %925 = vmatprep.subr.mxu0 0.0
        %926 = vmatpush1.msra.mxu0 0.0
        %927 = vmatprep.subr.mxu0 0.0
        %928 = vmatpush1.msra.mxu0 0.0
        %929 = vmatprep.subr.mxu0 0.0
        %930 = vmatpush1.msra.mxu0 0.0
        %931 = vmatprep.subr.mxu0 0.0
        %932 = vmatpush1.msra.mxu0 0.0
        %933 = vmatprep.subr.mxu0 0.0
        %934 = vmatpush1.msra.mxu0 0.0
        %935 = vmatprep.subr.mxu0 0.0
        %936 = vmatpush1.msra.mxu0 0.0
        %937 = vmatprep.subr.mxu0 0.0
        %938 = vmatpush1.msra.mxu0 0.0
        %939 = vmatprep.subr.mxu0 0.0
        %940 = vmatpush1.msra.mxu0 0.0
        %941 = vmatprep.subr.mxu0 0.0
        %942 = vmatpush1.msra.mxu0 0.0
        %943 = vmatprep.subr.mxu0 0.0
        %944 = vmatpush1.msra.mxu0 0.0
        %945 = vmatprep.mubr.f32.mxu0 0.0
        %946 = vmatmul.mubr.f32.gmra.mrb[0].mxu0 %v879
        %v947 = vpop.f32.mrb[0].mxu0
        %v948 = vadd.f32 0.0, %v947
        %v949 = vpop.f32.mrb[0].mxu0
        %950 = vdwg.mxu0
        %951 = vst.msk [vmem:[#allocation2 + $0x8] sm:$0xff] %vm623, %v948
        %952 = vrot.lane.b32.xlu0 %v448, 112
        %v953 = vpop.permute.xlu0 %952
        %954 = vrot.lane.b32.xlu0 %v535, 112
        %v955 = vpop.permute.xlu0 %954
        %v956 = vsel %vm623, %v953, 0
        %v958 = vsel %vm623, %v955, 0
        %960 = vmatprep.subr.mxu0 0.0
        %961 = vmatpush1.xpose.msra.mxu0 %v958
        %962 = vmatprep.subr.mxu0 0.0
        %963 = vmatpush1.xpose.msra.mxu0 0.0
        %964 = vmatprep.subr.mxu0 0.0
        %965 = vmatpush1.xpose.msra.mxu0 0.0
        %966 = vmatprep.subr.mxu0 0.0
        %967 = vmatpush1.xpose.msra.mxu0 0.0
        %968 = vmatprep.subr.mxu0 0.0
        %969 = vmatpush1.xpose.msra.mxu0 0.0
        %970 = vmatprep.subr.mxu0 0.0
        %971 = vmatpush1.xpose.msra.mxu0 0.0
        %972 = vmatprep.subr.mxu0 0.0
        %973 = vmatpush1.xpose.msra.mxu0 0.0
        %974 = vmatprep.subr.mxu0 0.0
        %975 = vmatpush1.xpose.msra.mxu0 0.0
        %976 = vmatprep.subr.mxu0 0.0
        %977 = vmatpush1.xpose.msra.mxu0 0.0
        %978 = vmatprep.subr.mxu0 0.0
        %979 = vmatpush1.xpose.msra.mxu0 0.0
        %980 = vmatprep.subr.mxu0 0.0
        %981 = vmatpush1.xpose.msra.mxu0 0.0
        %982 = vmatprep.subr.mxu0 0.0
        %983 = vmatpush1.xpose.msra.mxu0 0.0
        %984 = vmatprep.subr.mxu0 0.0
        %985 = vmatpush1.xpose.msra.mxu0 0.0
        %986 = vmatprep.subr.mxu0 0.0
        %987 = vmatpush1.xpose.msra.mxu0 0.0
        %988 = vmatprep.subr.mxu0 0.0
        %989 = vmatpush1.xpose.msra.mxu0 0.0
        %990 = vmatprep.subr.mxu0 0.0
        %991 = vmatpush1.xpose.msra.mxu0 0.0
        %992 = vmatprep.subr.mxu0 0.0
        %993 = vmatpush1.xpose.msra.mxu0 0.0
        %994 = vmatprep.subr.mxu0 0.0
        %995 = vmatpush1.xpose.msra.mxu0 0.0
        %996 = vmatprep.subr.mxu0 0.0
        %997 = vmatpush1.xpose.msra.mxu0 0.0
        %998 = vmatprep.subr.mxu0 0.0
        %999 = vmatpush1.xpose.msra.mxu0 0.0
        %1000 = vmatprep.subr.mxu0 0.0
        %1001 = vmatpush1.xpose.msra.mxu0 0.0
        %1002 = vmatprep.subr.mxu0 0.0
        %1003 = vmatpush1.xpose.msra.mxu0 0.0
        %1004 = vmatprep.subr.mxu0 0.0
        %1005 = vmatpush1.xpose.msra.mxu0 0.0
        %1006 = vmatprep.subr.mxu0 0.0
        %1007 = vmatpush1.xpose.msra.mxu0 0.0
        %1008 = vmatprep.subr.mxu0 0.0
        %1009 = vmatpush1.xpose.msra.mxu0 0.0
        %1010 = vmatprep.subr.mxu0 0.0
        %1011 = vmatpush1.xpose.msra.mxu0 0.0
        %1012 = vmatprep.subr.mxu0 0.0
        %1013 = vmatpush1.xpose.msra.mxu0 0.0
        %1014 = vmatprep.subr.mxu0 0.0
        %1015 = vmatpush1.xpose.msra.mxu0 0.0
        %1016 = vmatprep.subr.mxu0 0.0
        %1017 = vmatpush1.xpose.msra.mxu0 0.0
        %1018 = vmatprep.subr.mxu0 0.0
        %1019 = vmatpush1.xpose.msra.mxu0 0.0
        %1020 = vmatprep.subr.mxu0 0.0
        %1021 = vmatpush1.xpose.msra.mxu0 0.0
        %1022 = vmatprep.subr.mxu0 0.0
        %1023 = vmatpush1.xpose.msra.mxu0 0.0
        %1024 = vmatprep.mubr.f32.mxu0 0.0
        %1025 = vmatmul.mubr.f32.gmra.mrb[0].mxu0 %v956
        %v1026 = vpop.f32.mrb[0].mxu0
        %v1027 = vadd.f32 0.0, %v1026
        %v1028 = vpop.f32.mrb[0].mxu0
        %1029 = vdwg.mxu0
        %v1030 = vsel %vm623, %v1027, -inf
        %1031 = vmax.xlane.f32.xlu0 %v1030
        %v1032 = vpop.xlane.xlu0 %1031
        %v1033 = vsub.f32 %v1027, %v1032
        %v1034 = vmul.f32 %v1033, 1.442695
        %v1035 = vpow.pop %v1034
        %v1036 = vsel %vm623, %v1035, 0.0
        %1037 = vadd.xlane.f32.xlu0 %v1036
        %v1038 = vpop.xlane.xlu0 %1037
        %v1039 = vrcp.pop %v1038
        %v1040 = vmul.f32 %v1035, %v1039
        %1041 = vrot.lane.b32.xlu0 %v620, 112
        %v1042 = vpop.permute.xlu0 %1041
        %v1045 = vsel %vm623, %v1040, 0
        %1047 = vmatprep.subr.mxu0 0.0
        %1048 = vmatpush1.msra.mxu0 %v1042
        %1049 = vmatprep.subr.mxu0 0.0
        %1050 = vmatpush1.msra.mxu0 0.0
        %1051 = vmatprep.subr.mxu0 0.0
        %1052 = vmatpush1.msra.mxu0 0.0
        %1053 = vmatprep.subr.mxu0 0.0
        %1054 = vmatpush1.msra.mxu0 0.0
        %1055 = vmatprep.subr.mxu0 0.0
        %1056 = vmatpush1.msra.mxu0 0.0
        %1057 = vmatprep.subr.mxu0 0.0
        %1058 = vmatpush1.msra.mxu0 0.0
        %1059 = vmatprep.subr.mxu0 0.0
        %1060 = vmatpush1.msra.mxu0 0.0
        %1061 = vmatprep.subr.mxu0 0.0
        %1062 = vmatpush1.msra.mxu0 0.0
        %1063 = vmatprep.subr.mxu0 0.0
        %1064 = vmatpush1.msra.mxu0 0.0
        %1065 = vmatprep.subr.mxu0 0.0
        %1066 = vmatpush1.msra.mxu0 0.0
        %1067 = vmatprep.subr.mxu0 0.0
        %1068 = vmatpush1.msra.mxu0 0.0
        %1069 = vmatprep.subr.mxu0 0.0
        %1070 = vmatpush1.msra.mxu0 0.0
        %1071 = vmatprep.subr.mxu0 0.0
        %1072 = vmatpush1.msra.mxu0 0.0
        %1073 = vmatprep.subr.mxu0 0.0
        %1074 = vmatpush1.msra.mxu0 0.0
        %1075 = vmatprep.subr.mxu0 0.0
        %1076 = vmatpush1.msra.mxu0 0.0
        %1077 = vmatprep.subr.mxu0 0.0
        %1078 = vmatpush1.msra.mxu0 0.0
        %1079 = vmatprep.subr.mxu0 0.0
        %1080 = vmatpush1.msra.mxu0 0.0
        %1081 = vmatprep.subr.mxu0 0.0
        %1082 = vmatpush1.msra.mxu0 0.0
        %1083 = vmatprep.subr.mxu0 0.0
        %1084 = vmatpush1.msra.mxu0 0.0
        %1085 = vmatprep.subr.mxu0 0.0
        %1086 = vmatpush1.msra.mxu0 0.0
        %1087 = vmatprep.subr.mxu0 0.0
        %1088 = vmatpush1.msra.mxu0 0.0
        %1089 = vmatprep.subr.mxu0 0.0
        %1090 = vmatpush1.msra.mxu0 0.0
        %1091 = vmatprep.subr.mxu0 0.0
        %1092 = vmatpush1.msra.mxu0 0.0
        %1093 = vmatprep.subr.mxu0 0.0
        %1094 = vmatpush1.msra.mxu0 0.0
        %1095 = vmatprep.subr.mxu0 0.0
        %1096 = vmatpush1.msra.mxu0 0.0
        %1097 = vmatprep.subr.mxu0 0.0
        %1098 = vmatpush1.msra.mxu0 0.0
        %1099 = vmatprep.subr.mxu0 0.0
        %1100 = vmatpush1.msra.mxu0 0.0
        %1101 = vmatprep.subr.mxu0 0.0
        %1102 = vmatpush1.msra.mxu0 0.0
        %1103 = vmatprep.subr.mxu0 0.0
        %1104 = vmatpush1.msra.mxu0 0.0
        %1105 = vmatprep.subr.mxu0 0.0
        %1106 = vmatpush1.msra.mxu0 0.0
        %1107 = vmatprep.subr.mxu0 0.0
        %1108 = vmatpush1.msra.mxu0 0.0
        %1109 = vmatprep.subr.mxu0 0.0
        %1110 = vmatpush1.msra.mxu0 0.0
        %1111 = vmatprep.mubr.f32.mxu0 0.0
        %1112 = vmatmul.mubr.f32.gmra.mrb[0].mxu0 %v1045
        %v1113 = vpop.f32.mrb[0].mxu0
        %v1114 = vadd.f32 0.0, %v1113
        %v1115 = vpop.f32.mrb[0].mxu0
        %1116 = vdwg.mxu0
        %1117 = vst.msk [vmem:[#allocation2 + $0x10] sm:$0xff] %vm623, %v1114
        %1118 = vrot.lane.b32.xlu0 %v448, 104
        %v1119 = vpop.permute.xlu0 %1118
        %1120 = vrot.lane.b32.xlu0 %v535, 104
        %v1121 = vpop.permute.xlu0 %1120
        %v1122 = vsel %vm623, %v1119, 0
        %v1124 = vsel %vm623, %v1121, 0
        %1126 = vmatprep.subr.mxu0 0.0
        %1127 = vmatpush1.xpose.msra.mxu0 %v1124
        %1128 = vmatprep.subr.mxu0 0.0
        %1129 = vmatpush1.xpose.msra.mxu0 0.0
        %1130 = vmatprep.subr.mxu0 0.0
        %1131 = vmatpush1.xpose.msra.mxu0 0.0
        %1132 = vmatprep.subr.mxu0 0.0
        %1133 = vmatpush1.xpose.msra.mxu0 0.0
        %1134 = vmatprep.subr.mxu0 0.0
        %1135 = vmatpush1.xpose.msra.mxu0 0.0
        %1136 = vmatprep.subr.mxu0 0.0
        %1137 = vmatpush1.xpose.msra.mxu0 0.0
        %1138 = vmatprep.subr.mxu0 0.0
        %1139 = vmatpush1.xpose.msra.mxu0 0.0
        %1140 = vmatprep.subr.mxu0 0.0
        %1141 = vmatpush1.xpose.msra.mxu0 0.0
        %1142 = vmatprep.subr.mxu0 0.0
        %1143 = vmatpush1.xpose.msra.mxu0 0.0
        %1144 = vmatprep.subr.mxu0 0.0
        %1145 = vmatpush1.xpose.msra.mxu0 0.0
        %1146 = vmatprep.subr.mxu0 0.0
        %1147 = vmatpush1.xpose.msra.mxu0 0.0
        %1148 = vmatprep.subr.mxu0 0.0
        %1149 = vmatpush1.xpose.msra.mxu0 0.0
        %1150 = vmatprep.subr.mxu0 0.0
        %1151 = vmatpush1.xpose.msra.mxu0 0.0
        %1152 = vmatprep.subr.mxu0 0.0
        %1153 = vmatpush1.xpose.msra.mxu0 0.0
        %1154 = vmatprep.subr.mxu0 0.0
        %1155 = vmatpush1.xpose.msra.mxu0 0.0
        %1156 = vmatprep.subr.mxu0 0.0
        %1157 = vmatpush1.xpose.msra.mxu0 0.0
        %1158 = vmatprep.subr.mxu0 0.0
        %1159 = vmatpush1.xpose.msra.mxu0 0.0
        %1160 = vmatprep.subr.mxu0 0.0
        %1161 = vmatpush1.xpose.msra.mxu0 0.0
        %1162 = vmatprep.subr.mxu0 0.0
        %1163 = vmatpush1.xpose.msra.mxu0 0.0
        %1164 = vmatprep.subr.mxu0 0.0
        %1165 = vmatpush1.xpose.msra.mxu0 0.0
        %1166 = vmatprep.subr.mxu0 0.0
        %1167 = vmatpush1.xpose.msra.mxu0 0.0
        %1168 = vmatprep.subr.mxu0 0.0
        %1169 = vmatpush1.xpose.msra.mxu0 0.0
        %1170 = vmatprep.subr.mxu0 0.0
        %1171 = vmatpush1.xpose.msra.mxu0 0.0
        %1172 = vmatprep.subr.mxu0 0.0
        %1173 = vmatpush1.xpose.msra.mxu0 0.0
        %1174 = vmatprep.subr.mxu0 0.0
        %1175 = vmatpush1.xpose.msra.mxu0 0.0
        %1176 = vmatprep.subr.mxu0 0.0
        %1177 = vmatpush1.xpose.msra.mxu0 0.0
        %1178 = vmatprep.subr.mxu0 0.0
        %1179 = vmatpush1.xpose.msra.mxu0 0.0
        %1180 = vmatprep.subr.mxu0 0.0
        %1181 = vmatpush1.xpose.msra.mxu0 0.0
        %1182 = vmatprep.subr.mxu0 0.0
        %1183 = vmatpush1.xpose.msra.mxu0 0.0
        %1184 = vmatprep.subr.mxu0 0.0
        %1185 = vmatpush1.xpose.msra.mxu0 0.0
        %1186 = vmatprep.subr.mxu0 0.0
        %1187 = vmatpush1.xpose.msra.mxu0 0.0
        %1188 = vmatprep.subr.mxu0 0.0
        %1189 = vmatpush1.xpose.msra.mxu0 0.0
        %1190 = vmatprep.mubr.f32.mxu0 0.0
        %1191 = vmatmul.mubr.f32.gmra.mrb[0].mxu0 %v1122
        %v1192 = vpop.f32.mrb[0].mxu0
        %v1193 = vadd.f32 0.0, %v1192
        %v1194 = vpop.f32.mrb[0].mxu0
        %1195 = vdwg.mxu0
        %v1196 = vsel %vm623, %v1193, -inf
        %1197 = vmax.xlane.f32.xlu0 %v1196
        %v1198 = vpop.xlane.xlu0 %1197
        %v1199 = vsub.f32 %v1193, %v1198
        %v1200 = vmul.f32 %v1199, 1.442695
        %v1201 = vpow.pop %v1200
        %v1202 = vsel %vm623, %v1201, 0.0
        %1203 = vadd.xlane.f32.xlu0 %v1202
        %v1204 = vpop.xlane.xlu0 %1203
        %v1205 = vrcp.pop %v1204
        %v1206 = vmul.f32 %v1201, %v1205
        %1207 = vrot.lane.b32.xlu0 %v620, 104
        %v1208 = vpop.permute.xlu0 %1207
        %v1211 = vsel %vm623, %v1206, 0
        %1213 = vmatprep.subr.mxu0 0.0
        %1214 = vmatpush1.msra.mxu0 %v1208
        %1215 = vmatprep.subr.mxu0 0.0
        %1216 = vmatpush1.msra.mxu0 0.0
        %1217 = vmatprep.subr.mxu0 0.0
        %1218 = vmatpush1.msra.mxu0 0.0
        %1219 = vmatprep.subr.mxu0 0.0
        %1220 = vmatpush1.msra.mxu0 0.0
        %1221 = vmatprep.subr.mxu0 0.0
        %1222 = vmatpush1.msra.mxu0 0.0
        %1223 = vmatprep.subr.mxu0 0.0
        %1224 = vmatpush1.msra.mxu0 0.0
        %1225 = vmatprep.subr.mxu0 0.0
        %1226 = vmatpush1.msra.mxu0 0.0
        %1227 = vmatprep.subr.mxu0 0.0
        %1228 = vmatpush1.msra.mxu0 0.0
        %1229 = vmatprep.subr.mxu0 0.0
        %1230 = vmatpush1.msra.mxu0 0.0
        %1231 = vmatprep.subr.mxu0 0.0
        %1232 = vmatpush1.msra.mxu0 0.0
        %1233 = vmatprep.subr.mxu0 0.0
        %1234 = vmatpush1.msra.mxu0 0.0
        %1235 = vmatprep.subr.mxu0 0.0
        %1236 = vmatpush1.msra.mxu0 0.0
        %1237 = vmatprep.subr.mxu0 0.0
        %1238 = vmatpush1.msra.mxu0 0.0
        %1239 = vmatprep.subr.mxu0 0.0
        %1240 = vmatpush1.msra.mxu0 0.0
        %1241 = vmatprep.subr.mxu0 0.0
        %1242 = vmatpush1.msra.mxu0 0.0
        %1243 = vmatprep.subr.mxu0 0.0
        %1244 = vmatpush1.msra.mxu0 0.0
        %1245 = vmatprep.subr.mxu0 0.0
        %1246 = vmatpush1.msra.mxu0 0.0
        %1247 = vmatprep.subr.mxu0 0.0
        %1248 = vmatpush1.msra.mxu0 0.0
        %1249 = vmatprep.subr.mxu0 0.0
        %1250 = vmatpush1.msra.mxu0 0.0
        %1251 = vmatprep.subr.mxu0 0.0
        %1252 = vmatpush1.msra.mxu0 0.0
        %1253 = vmatprep.subr.mxu0 0.0
        %1254 = vmatpush1.msra.mxu0 0.0
        %1255 = vmatprep.subr.mxu0 0.0
        %1256 = vmatpush1.msra.mxu0 0.0
        %1257 = vmatprep.subr.mxu0 0.0
        %1258 = vmatpush1.msra.mxu0 0.0
        %1259 = vmatprep.subr.mxu0 0.0
        %1260 = vmatpush1.msra.mxu0 0.0
        %1261 = vmatprep.subr.mxu0 0.0
        %1262 = vmatpush1.msra.mxu0 0.0
        %1263 = vmatprep.subr.mxu0 0.0
        %1264 = vmatpush1.msra.mxu0 0.0
        %1265 = vmatprep.subr.mxu0 0.0
        %1266 = vmatpush1.msra.mxu0 0.0
        %1267 = vmatprep.subr.mxu0 0.0
        %1268 = vmatpush1.msra.mxu0 0.0
        %1269 = vmatprep.subr.mxu0 0.0
        %1270 = vmatpush1.msra.mxu0 0.0
        %1271 = vmatprep.subr.mxu0 0.0
        %1272 = vmatpush1.msra.mxu0 0.0
        %1273 = vmatprep.subr.mxu0 0.0
        %1274 = vmatpush1.msra.mxu0 0.0
        %1275 = vmatprep.subr.mxu0 0.0
        %1276 = vmatpush1.msra.mxu0 0.0
        %1277 = vmatprep.mubr.f32.mxu0 0.0
        %1278 = vmatmul.mubr.f32.gmra.mrb[0].mxu0 %v1211
        %v1279 = vpop.f32.mrb[0].mxu0
        %v1280 = vadd.f32 0.0, %v1279
        %v1281 = vpop.f32.mrb[0].mxu0
        %1282 = vdwg.mxu0
        %1283 = vst.msk [vmem:[#allocation2 + $0x18] sm:$0xff] %vm623, %v1280
        %v1284 = vld [vmem:[#allocation2] ss:$4 sm:$0xff]
        %v1285 = vld [vmem:[#allocation11] sm:$0xff]
        %s1286 = scalar_lea.vmem [#allocation2], 1
        %v1287 = vld [vmem:[%s1286] ss:$4 sm:$0xff]
        %v1288 = vld [vmem:[#allocation11 + $0x8] sm:$0xff]
        %v1290 = vsel %vm623, %v1287, 0
        %1292 = vmatprep.subr.mxu0 0.0
        %1293 = vmatpush1.msra.mxu0 %v1288
        %1294 = vmatprep.subr.mxu0 0.0
        %1295 = vmatpush1.msra.mxu0 0.0
        %1296 = vmatprep.subr.mxu0 0.0
        %1297 = vmatpush1.msra.mxu0 0.0
        %1298 = vmatprep.subr.mxu0 0.0
        %1299 = vmatpush1.msra.mxu0 0.0
        %1300 = vmatprep.subr.mxu0 0.0
        %1301 = vmatpush1.msra.mxu0 0.0
        %1302 = vmatprep.subr.mxu0 0.0
        %1303 = vmatpush1.msra.mxu0 0.0
        %1304 = vmatprep.subr.mxu0 0.0
        %1305 = vmatpush1.msra.mxu0 0.0
        %1306 = vmatprep.subr.mxu0 0.0
        %1307 = vmatpush1.msra.mxu0 0.0
        %1308 = vmatprep.subr.mxu0 0.0
        %1309 = vmatpush1.msra.mxu0 0.0
        %1310 = vmatprep.subr.mxu0 0.0
        %1311 = vmatpush1.msra.mxu0 0.0
        %1312 = vmatprep.subr.mxu0 0.0
        %1313 = vmatpush1.msra.mxu0 0.0
        %1314 = vmatprep.subr.mxu0 0.0
        %1315 = vmatpush1.msra.mxu0 0.0
        %1316 = vmatprep.subr.mxu0 0.0
        %1317 = vmatpush1.msra.mxu0 0.0
        %1318 = vmatprep.subr.mxu0 0.0
        %1319 = vmatpush1.msra.mxu0 0.0
        %1320 = vmatprep.subr.mxu0 0.0
        %1321 = vmatpush1.msra.mxu0 0.0
        %1322 = vmatprep.subr.mxu0 0.0
        %1323 = vmatpush1.msra.mxu0 0.0
        %1324 = vmatprep.subr.mxu0 0.0
        %1325 = vmatpush1.msra.mxu0 0.0
        %1326 = vmatprep.subr.mxu0 0.0
        %1327 = vmatpush1.msra.mxu0 0.0
        %1328 = vmatprep.subr.mxu0 0.0
        %1329 = vmatpush1.msra.mxu0 0.0
        %1330 = vmatprep.subr.mxu0 0.0
        %1331 = vmatpush1.msra.mxu0 0.0
        %1332 = vmatprep.subr.mxu0 0.0
        %1333 = vmatpush1.msra.mxu0 0.0
        %1334 = vmatprep.subr.mxu0 0.0
        %1335 = vmatpush1.msra.mxu0 0.0
        %1336 = vmatprep.subr.mxu0 0.0
        %1337 = vmatpush1.msra.mxu0 0.0
        %1338 = vmatprep.subr.mxu0 0.0
        %1339 = vmatpush1.msra.mxu0 0.0
        %1340 = vmatprep.subr.mxu0 0.0
        %1341 = vmatpush1.msra.mxu0 0.0
        %1342 = vmatprep.subr.mxu0 0.0
        %1343 = vmatpush1.msra.mxu0 0.0
        %1344 = vmatprep.subr.mxu0 0.0
        %1345 = vmatpush1.msra.mxu0 0.0
        %1346 = vmatprep.subr.mxu0 0.0
        %1347 = vmatpush1.msra.mxu0 0.0
        %1348 = vmatprep.subr.mxu0 0.0
        %1349 = vmatpush1.msra.mxu0 0.0
        %1350 = vmatprep.subr.mxu0 0.0
        %1351 = vmatpush1.msra.mxu0 0.0
        %1352 = vmatprep.subr.mxu0 0.0
        %1353 = vmatpush1.msra.mxu0 0.0
        %1354 = vmatprep.subr.mxu0 0.0
        %1355 = vmatpush1.msra.mxu0 0.0
        %1356 = vmatprep.mubr.f32.mxu0 0.0
        %1357 = vmatmul.mubr.f32.gmra.mrb[0].mxu0 %v1290
        %v1358 = vpop.f32.mrb[0].mxu0
        %v1359 = vadd.f32 0.0, %v1358
        %v1360 = vpop.f32.mrb[0].mxu0
        %1361 = vdwg.mxu0
        %v1363 = vsel %vm623, %v1284, 0
        %1365 = vmatprep.subr.mxu0 0.0
        %1366 = vmatpush1.msra.mxu0 %v1285
        %1367 = vmatprep.subr.mxu0 0.0
        %1368 = vmatpush1.msra.mxu0 0.0
        %1369 = vmatprep.subr.mxu0 0.0
        %1370 = vmatpush1.msra.mxu0 0.0
        %1371 = vmatprep.subr.mxu0 0.0
        %1372 = vmatpush1.msra.mxu0 0.0
        %1373 = vmatprep.subr.mxu0 0.0
        %1374 = vmatpush1.msra.mxu0 0.0
        %1375 = vmatprep.subr.mxu0 0.0
        %1376 = vmatpush1.msra.mxu0 0.0
        %1377 = vmatprep.subr.mxu0 0.0
        %1378 = vmatpush1.msra.mxu0 0.0
        %1379 = vmatprep.subr.mxu0 0.0
        %1380 = vmatpush1.msra.mxu0 0.0
        %1381 = vmatprep.subr.mxu0 0.0
        %1382 = vmatpush1.msra.mxu0 0.0
        %1383 = vmatprep.subr.mxu0 0.0
        %1384 = vmatpush1.msra.mxu0 0.0
        %1385 = vmatprep.subr.mxu0 0.0
        %1386 = vmatpush1.msra.mxu0 0.0
        %1387 = vmatprep.subr.mxu0 0.0
        %1388 = vmatpush1.msra.mxu0 0.0
        %1389 = vmatprep.subr.mxu0 0.0
        %1390 = vmatpush1.msra.mxu0 0.0
        %1391 = vmatprep.subr.mxu0 0.0
        %1392 = vmatpush1.msra.mxu0 0.0
        %1393 = vmatprep.subr.mxu0 0.0
        %1394 = vmatpush1.msra.mxu0 0.0
        %1395 = vmatprep.subr.mxu0 0.0
        %1396 = vmatpush1.msra.mxu0 0.0
        %1397 = vmatprep.subr.mxu0 0.0
        %1398 = vmatpush1.msra.mxu0 0.0
        %1399 = vmatprep.subr.mxu0 0.0
        %1400 = vmatpush1.msra.mxu0 0.0
        %1401 = vmatprep.subr.mxu0 0.0
        %1402 = vmatpush1.msra.mxu0 0.0
        %1403 = vmatprep.subr.mxu0 0.0
        %1404 = vmatpush1.msra.mxu0 0.0
        %1405 = vmatprep.subr.mxu0 0.0
        %1406 = vmatpush1.msra.mxu0 0.0
        %1407 = vmatprep.subr.mxu0 0.0
        %1408 = vmatpush1.msra.mxu0 0.0
        %1409 = vmatprep.subr.mxu0 0.0
        %1410 = vmatpush1.msra.mxu0 0.0
        %1411 = vmatprep.subr.mxu0 0.0
        %1412 = vmatpush1.msra.mxu0 0.0
        %1413 = vmatprep.subr.mxu0 0.0
        %1414 = vmatpush1.msra.mxu0 0.0
        %1415 = vmatprep.subr.mxu0 0.0
        %1416 = vmatpush1.msra.mxu0 0.0
        %1417 = vmatprep.subr.mxu0 0.0
        %1418 = vmatpush1.msra.mxu0 0.0
        %1419 = vmatprep.subr.mxu0 0.0
        %1420 = vmatpush1.msra.mxu0 0.0
        %1421 = vmatprep.subr.mxu0 0.0
        %1422 = vmatpush1.msra.mxu0 0.0
        %1423 = vmatprep.subr.mxu0 0.0
        %1424 = vmatpush1.msra.mxu0 0.0
        %1425 = vmatprep.subr.mxu0 0.0
        %1426 = vmatpush1.msra.mxu0 0.0
        %1427 = vmatprep.subr.mxu0 0.0
        %1428 = vmatpush1.msra.mxu0 0.0
        %1429 = vmatprep.mubr.f32.mxu0 0.0
        %1430 = vmatmul.mubr.f32.gmra.mrb[0].mxu0 %v1363
        %v1431 = vpop.f32.mrb[0].mxu0
        %v1432 = vadd.f32 %v1359, %v1431
        %v1433 = vpop.f32.mrb[0].mxu0
        %1434 = vdwg.mxu0
        %s1435 = scalar_lea.vmem [#allocation2], 2
        %v1436 = vld [vmem:[%s1435] ss:$4 sm:$0xff]
        %v1437 = vld [vmem:[#allocation11 + $0x10] sm:$0xff]
        %v1439 = vsel %vm623, %v1436, 0
        %1441 = vmatprep.subr.mxu0 0.0
        %1442 = vmatpush1.msra.mxu0 %v1437
        %1443 = vmatprep.subr.mxu0 0.0
        %1444 = vmatpush1.msra.mxu0 0.0
        %1445 = vmatprep.subr.mxu0 0.0
        %1446 = vmatpush1.msra.mxu0 0.0
        %1447 = vmatprep.subr.mxu0 0.0
        %1448 = vmatpush1.msra.mxu0 0.0
        %1449 = vmatprep.subr.mxu0 0.0
        %1450 = vmatpush1.msra.mxu0 0.0
        %1451 = vmatprep.subr.mxu0 0.0
        %1452 = vmatpush1.msra.mxu0 0.0
        %1453 = vmatprep.subr.mxu0 0.0
        %1454 = vmatpush1.msra.mxu0 0.0
        %1455 = vmatprep.subr.mxu0 0.0
        %1456 = vmatpush1.msra.mxu0 0.0
        %1457 = vmatprep.subr.mxu0 0.0
        %1458 = vmatpush1.msra.mxu0 0.0
        %1459 = vmatprep.subr.mxu0 0.0
        %1460 = vmatpush1.msra.mxu0 0.0
        %1461 = vmatprep.subr.mxu0 0.0
        %1462 = vmatpush1.msra.mxu0 0.0
        %1463 = vmatprep.subr.mxu0 0.0
        %1464 = vmatpush1.msra.mxu0 0.0
        %1465 = vmatprep.subr.mxu0 0.0
        %1466 = vmatpush1.msra.mxu0 0.0
        %1467 = vmatprep.subr.mxu0 0.0
        %1468 = vmatpush1.msra.mxu0 0.0
        %1469 = vmatprep.subr.mxu0 0.0
        %1470 = vmatpush1.msra.mxu0 0.0
        %1471 = vmatprep.subr.mxu0 0.0
        %1472 = vmatpush1.msra.mxu0 0.0
        %1473 = vmatprep.subr.mxu0 0.0
        %1474 = vmatpush1.msra.mxu0 0.0
        %1475 = vmatprep.subr.mxu0 0.0
        %1476 = vmatpush1.msra.mxu0 0.0
        %1477 = vmatprep.subr.mxu0 0.0
        %1478 = vmatpush1.msra.mxu0 0.0
        %1479 = vmatprep.subr.mxu0 0.0
        %1480 = vmatpush1.msra.mxu0 0.0
        %1481 = vmatprep.subr.mxu0 0.0
        %1482 = vmatpush1.msra.mxu0 0.0
        %1483 = vmatprep.subr.mxu0 0.0
        %1484 = vmatpush1.msra.mxu0 0.0
        %1485 = vmatprep.subr.mxu0 0.0
        %1486 = vmatpush1.msra.mxu0 0.0
        %1487 = vmatprep.subr.mxu0 0.0
        %1488 = vmatpush1.msra.mxu0 0.0
        %1489 = vmatprep.subr.mxu0 0.0
        %1490 = vmatpush1.msra.mxu0 0.0
        %1491 = vmatprep.subr.mxu0 0.0
        %1492 = vmatpush1.msra.mxu0 0.0
        %1493 = vmatprep.subr.mxu0 0.0
        %1494 = vmatpush1.msra.mxu0 0.0
        %1495 = vmatprep.subr.mxu0 0.0
        %1496 = vmatpush1.msra.mxu0 0.0
        %1497 = vmatprep.subr.mxu0 0.0
        %1498 = vmatpush1.msra.mxu0 0.0
        %1499 = vmatprep.subr.mxu0 0.0
        %1500 = vmatpush1.msra.mxu0 0.0
        %1501 = vmatprep.subr.mxu0 0.0
        %1502 = vmatpush1.msra.mxu0 0.0
        %1503 = vmatprep.subr.mxu0 0.0
        %1504 = vmatpush1.msra.mxu0 0.0
        %1505 = vmatprep.mubr.f32.mxu0 0.0
        %1506 = vmatmul.mubr.f32.gmra.mrb[0].mxu0 %v1439
        %v1507 = vpop.f32.mrb[0].mxu0
        %v1508 = vadd.f32 0.0, %v1507
        %v1509 = vpop.f32.mrb[0].mxu0
        %1510 = vdwg.mxu0
        %v1511 = vadd.f32 %v1432, %v1508
        %s1512 = scalar_lea.vmem [#allocation2], 3
        %v1513 = vld [vmem:[%s1512] ss:$4 sm:$0xff]
        %v1514 = vld [vmem:[#allocation11 + $0x18] sm:$0xff]
        %v1516 = vsel %vm623, %v1513, 0
        %1518 = vmatprep.subr.mxu0 0.0
        %1519 = vmatpush1.msra.mxu0 %v1514
        %1520 = vmatprep.subr.mxu0 0.0
        %1521 = vmatpush1.msra.mxu0 0.0
        %1522 = vmatprep.subr.mxu0 0.0
        %1523 = vmatpush1.msra.mxu0 0.0
        %1524 = vmatprep.subr.mxu0 0.0
        %1525 = vmatpush1.msra.mxu0 0.0
        %1526 = vmatprep.subr.mxu0 0.0
        %1527 = vmatpush1.msra.mxu0 0.0
        %1528 = vmatprep.subr.mxu0 0.0
        %1529 = vmatpush1.msra.mxu0 0.0
        %1530 = vmatprep.subr.mxu0 0.0
        %1531 = vmatpush1.msra.mxu0 0.0
        %1532 = vmatprep.subr.mxu0 0.0
        %1533 = vmatpush1.msra.mxu0 0.0
        %1534 = vmatprep.subr.mxu0 0.0
        %1535 = vmatpush1.msra.mxu0 0.0
        %1536 = vmatprep.subr.mxu0 0.0
        %1537 = vmatpush1.msra.mxu0 0.0
        %1538 = vmatprep.subr.mxu0 0.0
        %1539 = vmatpush1.msra.mxu0 0.0
        %1540 = vmatprep.subr.mxu0 0.0
        %1541 = vmatpush1.msra.mxu0 0.0
        %1542 = vmatprep.subr.mxu0 0.0
        %1543 = vmatpush1.msra.mxu0 0.0
        %1544 = vmatprep.subr.mxu0 0.0
        %1545 = vmatpush1.msra.mxu0 0.0
        %1546 = vmatprep.subr.mxu0 0.0
        %1547 = vmatpush1.msra.mxu0 0.0
        %1548 = vmatprep.subr.mxu0 0.0
        %1549 = vmatpush1.msra.mxu0 0.0
        %1550 = vmatprep.subr.mxu0 0.0
        %1551 = vmatpush1.msra.mxu0 0.0
        %1552 = vmatprep.subr.mxu0 0.0
        %1553 = vmatpush1.msra.mxu0 0.0
        %1554 = vmatprep.subr.mxu0 0.0
        %1555 = vmatpush1.msra.mxu0 0.0
        %1556 = vmatprep.subr.mxu0 0.0
        %1557 = vmatpush1.msra.mxu0 0.0
        %1558 = vmatprep.subr.mxu0 0.0
        %1559 = vmatpush1.msra.mxu0 0.0
        %1560 = vmatprep.subr.mxu0 0.0
        %1561 = vmatpush1.msra.mxu0 0.0
        %1562 = vmatprep.subr.mxu0 0.0
        %1563 = vmatpush1.msra.mxu0 0.0
        %1564 = vmatprep.subr.mxu0 0.0
        %1565 = vmatpush1.msra.mxu0 0.0
        %1566 = vmatprep.subr.mxu0 0.0
        %1567 = vmatpush1.msra.mxu0 0.0
        %1568 = vmatprep.subr.mxu0 0.0
        %1569 = vmatpush1.msra.mxu0 0.0
        %1570 = vmatprep.subr.mxu0 0.0
        %1571 = vmatpush1.msra.mxu0 0.0
        %1572 = vmatprep.subr.mxu0 0.0
        %1573 = vmatpush1.msra.mxu0 0.0
        %1574 = vmatprep.subr.mxu0 0.0
        %1575 = vmatpush1.msra.mxu0 0.0
        %1576 = vmatprep.subr.mxu0 0.0
        %1577 = vmatpush1.msra.mxu0 0.0
        %1578 = vmatprep.subr.mxu0 0.0
        %1579 = vmatpush1.msra.mxu0 0.0
        %1580 = vmatprep.subr.mxu0 0.0
        %1581 = vmatpush1.msra.mxu0 0.0
        %1582 = vmatprep.mubr.f32.mxu0 0.0
        %1583 = vmatmul.mubr.f32.gmra.mrb[0].mxu0 %v1516
        %v1584 = vpop.f32.mrb[0].mxu0
        %v1585 = vadd.f32 0.0, %v1584
        %v1586 = vpop.f32.mrb[0].mxu0
        %1587 = vdwg.mxu0
        %v1588 = vadd.f32 %v1511, %v1585
        %v1589 = vld [vmem:[%s5] sm:$0x1]
        %v1591 = vlaneseq
        %v1592 = vshrl.u32 %v1591, 7
        %v1593 = vsub.s32 0, %v1592
        %v1594 = vrot.slane %v1589, %v1593
        %v1596 = vadd.f32 %v1588, %v1594
        %1597 = vst.msk [vmem:[%s366] sm:$0xff] %vm374, %v1596
        %s1598 = sand.u32 %s176, 1
        %s1599 = scalar_lea.sflag [#allocation5], %s1598
        %s1600 = sand.u32 %s176, 1
        %s1601 = smul.addr %s1600, 8
        %s1602 = scalar_lea.vmem [#allocation12], %s1601
        // Predicated region
        $region65: #{tpu_custom_call.1} parent=43 // pred_check
          %p1603 = pneg %p186
        $region66: #{tpu_custom_call.1} parent=43 // pred_check_branch
          %1605 = sbr.rel (%p1603) target = $region68
        $region67: #{tpu_custom_call.1} parent=43 // pred_region
          %s1607 = ssub.s32 128, 128
          %1608 = vsyncadd %s1599, %s1607
          %s1609 = smul.addr %s27, 128
          %s1610 = scalar_lea.hbm %s6, %s1609
          %s1612 = sshll.u32 %s1602, 4
          %s1613 = int_to_ptr.vmem [resolvable:$true] %s1612
          %1615 = dma.vmem_to_hbm [thread:$0]  %s1613, 128, %s1610, %s1599
        $region68: #{tpu_custom_call.1} parent=43 // pred_fallthru
          _
      $region44: #{tpu_custom_call.1} parent=5 // pred_fallthru
        _
      %p1616 = scmp.le.s32.totalorder 2, %s22
      // Predicated region
      $region69: #{tpu_custom_call.1} parent=5 // pred_check
        %p1617 = pneg %p1616
      $region70: #{tpu_custom_call.1} parent=5 // pred_check_branch
        %1619 = sbr.rel (%p1617) target = $region72
      $region71: #{tpu_custom_call.1} parent=5 // pred_region
        %s1620 = ssub.s32 %s22, 2
        // Predicated region
        $region73: #{tpu_custom_call.1} parent=71 // pred_check
          %p1621 = pneg %p192
        $region74: #{tpu_custom_call.1} parent=71 // pred_check_branch
          %1623 = sbr.rel (%p1621) target = $region76
        $region75: #{tpu_custom_call.1} parent=71 // pred_region
          %s1624 = sand.u32 %s177, 1
          %s1625 = scalar_lea.sflag [#allocation5], %s1624
          %s1626 = sand.u32 %s177, 1
          %s1627 = smul.addr %s1626, 8
          %s1628 = scalar_lea.vmem [#allocation12], %s1627
          %1629 = dma.done %s1625, 128
        $region76: #{tpu_custom_call.1} parent=71 // pred_fallthru
          _
      $region72: #{tpu_custom_call.1} parent=5 // pred_fallthru
        _
    $region6: #{tpu_custom_call.1} parent=1 // loop_footer
      %s26 = sadd.s32 1, %s22
    $region7: #{tpu_custom_call.1} parent=1 // loop_footer_branch
      %21 = sbr.rel target = $region3
    $region8: #{tpu_custom_call.1} parent=1 // loop_exit
      _
    %1630 = vsyncpa [#allocation4], 1
    %s1631 = scalar_lea.sflag [#allocation4], 1
    %1632 = vsyncpa %s1631, 1
    %1633 = vsyncpa [#allocation7], 1
    %s1634 = scalar_lea.sflag [#allocation7], 1
    %1635 = vsyncpa %s1634, 1
    %1636 = vsyncpa [#allocation10], 1
    %1637 = vsyncpa [#allocation5], 1
    %s1638 = scalar_lea.sflag [#allocation5], 1
    %1639 = vsyncpa %s1638, 1

</llo_original>
